<compile_context>
chip_gen: v6e
topology: v6e:2x2x1
jax: 0.10.0
libtpu: 0.0.40
codegen_flags: <defaults>
</compile_context>

<pallas_src>
import jax
import jax.numpy as jnp
from jax.experimental import pallas as pl
from jax.experimental.pallas import tpu as pltpu

TEXT_DIM = 768                       # DistilBERT hidden size
CH1_OUT = 256                        # combined_head layer-1 width
REL_GROUP = 128                      # lane group carrying the relevance logit (lane 0)
CH1_PACKED = CH1_OUT + REL_GROUP     # 384-wide fused layer-1 output
HEAD_GROUP = 128                     # packed policy|value output group
OUT_WIDTH = HEAD_GROUP + REL_GROUP   # 256-wide lane-dense output slab


def _round_up(x, m):
    return (x + m - 1) // m * m


def _gaming_net_kernel(
    # per-tile activations
    text_ref, state_ref,
    # state_encoder params
    se_w1, se_b1, se_w2, se_b2,
    # fused combined_head layer 1 (+ relevance) params
    w1_text, w1_state, b1,
    # combined_head layer 2
    ch_w2, ch_b2,
    # fused policy|value head
    head_w, head_b,
    # lane-dense output slab
    out_ref,
):
    x_text = text_ref[...]            # (TB, 768)  bf16
    x_state = state_ref[...]          # (TB, S)    bf16

    # ---- state_encoder: Linear(S,128)+ReLU -> Linear(128,64)+ReLU ----
    # TODO(synk): K=32/K=64 under-fill the MXU; could be folded onto the VPU,
    # accepted as a minor inefficiency (dominant cost is the 768-wide matmul).
    h = jnp.dot(x_state, se_w1[...], preferred_element_type=jnp.float32) + se_b1[...]
    h = jnp.maximum(h, 0.0).astype(jnp.bfloat16)
    s_emb = jnp.dot(h, se_w2[...], preferred_element_type=jnp.float32) + se_b2[...]
    s_emb = jnp.maximum(s_emb, 0.0).astype(jnp.bfloat16)            # (TB, 64)

    # ---- combined_head layer 1, fused with relevance head ----
    #   pre[:, :256] = concat(text, state) @ ch_w1 + ch_b1
    #   pre[:, 256]  = text @ rel_w + rel_b   (state part is zero-padded there)
    pre = (jnp.dot(x_text, w1_text[...], preferred_element_type=jnp.float32)
           + jnp.dot(s_emb, w1_state[...], preferred_element_type=jnp.float32)
           + b1[...])                                               # (TB, 384)

    c = jnp.maximum(pre[:, :CH1_OUT], 0.0).astype(jnp.bfloat16)     # (TB, 256)
    rel_group = jax.nn.sigmoid(pre[:, CH1_OUT:])                    # (TB, 128); lane 0 = relevance

    # ---- combined_head layer 2 ----
    feat = jnp.dot(c, ch_w2[...], preferred_element_type=jnp.float32) + ch_b2[...]
    feat = jnp.maximum(feat, 0.0).astype(jnp.bfloat16)              # (TB, 128)

    # ---- fused policy|value head: cols [0:A]=policy, col A=value, rest 0 ----
    head = jnp.dot(feat, head_w[...], preferred_element_type=jnp.float32) + head_b[...]

    # lane-group-aligned, unmasked 128-wide stores
    out_ref[:, :HEAD_GROUP] = head
    out_ref[:, HEAD_GROUP:] = rel_group


def advanced_gaming_net_forward(text_embeds, states, packed, action_size, *,
                                batch_tile=256):
    """Runs the fused kernel; returns (policy, value, relevance) as f32."""
    B = text_embeds.shape[0]
    S = states.shape[1]

    # Batch tile: multiple of 8 sublanes; 256 keeps the 256x256 MXU full on
    # v6e/v7x once batches are large.  Pad the batch to a multiple of TB.
    TB = min(batch_tile, _round_up(B, 8))
    B_pad = _round_up(B, TB)

    text = text_embeds.astype(jnp.bfloat16)
    state = states.astype(jnp.bfloat16)
    if B_pad != B:
        text = jnp.pad(text, ((0, B_pad - B), (0, 0)))
        state = jnp.pad(state, ((0, B_pad - B), (0, 0)))

    weight_args = (
        packed["se_w1"], packed["se_b1"], packed["se_w2"], packed["se_b2"],
        packed["w1_text"], packed["w1_state"], packed["b1"],
        packed["ch_w2"], packed["ch_b2"],
        packed["head_w"], packed["head_b"],
    )

    flops = 2 * B_pad * (S * 128 + 128 * 64
                         + TEXT_DIM * CH1_PACKED + 64 * CH1_PACKED
                         + CH1_OUT * 128 + 128 * HEAD_GROUP)
    bytes_accessed = (sum(int(w.size) * w.dtype.itemsize for w in weight_args)
                      + int(text.size) * 2 + int(state.size) * 2
                      + B_pad * OUT_WIDTH * 4)

    out = pl.pallas_call(
        _gaming_net_kernel,
        out_shape=jax.ShapeDtypeStruct((B_pad, OUT_WIDTH), jnp.float32),
        grid=(B_pad // TB,),
        in_specs=[
            pl.BlockSpec((TB, TEXT_DIM), lambda i: (i, 0)),
            pl.BlockSpec((TB, S), lambda i: (i, 0)),
            # weights/biases: full blocks, index_map -> (0,0) so they stay
            # VMEM-resident across all batch tiles.
            *[pl.BlockSpec(w.shape, lambda i: (0, 0)) for w in weight_args],
        ],
        out_specs=pl.BlockSpec((TB, OUT_WIDTH), lambda i: (i, 0)),
        compiler_params=pltpu.CompilerParams(
            dimension_semantics=("parallel",),      # megacore sharding on v7x
            vmem_limit_bytes=32 * 1024 * 1024,      # safe on v5e/v6e/v7x
        ),
        cost_estimate=pl.CostEstimate(
            flops=flops,
            transcendentals=B_pad * REL_GROUP,      # sigmoid lane group
            bytes_accessed=bytes_accessed,
        ),
    )(text, state, *weight_args)

    policy = out[:B, :action_size]
    value = out[:B, action_size:action_size + 1]
    relevance = out[:B, HEAD_GROUP:HEAD_GROUP + 1]
    return policy, value, relevance


# ----------------------------- parameters -----------------------------------

def init_params(key, state_size, action_size):
    """Logical (PyTorch-equivalent) f32 params; weights (in, out), biases (1, out)."""
    ks = jax.random.split(key, 16)

    def w(k, shape, scale=0.02):
        return (scale * jax.random.normal(k, shape)).astype(jnp.float32)

    return {
        # state_encoder
        "se_w1": w(ks[0], (state_size, 128)),
        "se_b1": w(ks[1], (1, 128)),
        "se_w2": w(ks[2], (128, 64)),
        "se_b2": w(ks[3], (1, 64)),
        # combined_head (first layer split: text part + state part)
        "ch_w1t": w(ks[4], (TEXT_DIM, 256)),
        "ch_w1s": w(ks[5], (64, 256)),
        "ch_b1": w(ks[6], (1, 256)),
        "ch_w2": w(ks[7], (256, 128)),
        "ch_b2": w(ks[8], (1, 128)),
        # policy / value heads
        "pol_w": w(ks[9], (128, action_size)),
        "pol_b": w(ks[10], (1, action_size)),
        "val_w": w(ks[11], (128, 1)),
        "val_b": w(ks[12], (1, 1)),
        # relevance head (stand-in for DistilBertForSequenceClassification head)
        "rel_w": w(ks[13], (TEXT_DIM, 1)),
        "rel_b": w(ks[14], (1, 1)),
    }


def pack_params(p, action_size):
    """Pack logical params into fused, bf16 kernel weights (biases stay f32)."""
    A = action_size
    assert A + 1 <= HEAD_GROUP, "action_size + value column must fit one lane group"

    # combined_head layer1 fused with relevance (column 256)
    w1_text = jnp.zeros((TEXT_DIM, CH1_PACKED), jnp.float32)
    w1_text = w1_text.at[:, :CH1_OUT].set(p["ch_w1t"])
    w1_text = w1_text.at[:, CH1_OUT:CH1_OUT + 1].set(p["rel_w"])
    w1_state = jnp.zeros((64, CH1_PACKED), jnp.float32).at[:, :CH1_OUT].set(p["ch_w1s"])
    b1 = jnp.zeros((1, CH1_PACKED), jnp.float32)
    b1 = b1.at[:, :CH1_OUT].set(p["ch_b1"]).at[:, CH1_OUT:CH1_OUT + 1].set(p["rel_b"])

    # fused policy|value head
    head_w = jnp.zeros((128, HEAD_GROUP), jnp.float32)
    head_w = head_w.at[:, :A].set(p["pol_w"]).at[:, A:A + 1].set(p["val_w"])
    head_b = jnp.zeros((1, HEAD_GROUP), jnp.float32)
    head_b = head_b.at[:, :A].set(p["pol_b"]).at[:, A:A + 1].set(p["val_b"])

    bf = lambda x: x.astype(jnp.bfloat16)
    return {
        "se_w1": bf(p["se_w1"]), "se_b1": p["se_b1"],
        "se_w2": bf(p["se_w2"]), "se_b2": p["se_b2"],
        "w1_text": bf(w1_text), "w1_state": bf(w1_state), "b1": b1,
        "ch_w2": bf(p["ch_w2"]), "ch_b2": p["ch_b2"],
        "head_w": bf(head_w), "head_b": head_b,
    }


# ----------------------------- reference -------------------------------------

def _reference_forward(text_embeds, states, p):
    """Pure-JAX f32 reference (matches the PyTorch forward semantics)."""
    h = jnp.maximum(states @ p["se_w1"] + p["se_b1"], 0.0)
    s_emb = jnp.maximum(h @ p["se_w2"] + p["se_b2"], 0.0)
    combined = jnp.concatenate([text_embeds, s_emb], axis=-1)
    w1 = jnp.concatenate([p["ch_w1t"], p["ch_w1s"]], axis=0)
    c = jnp.maximum(combined @ w1 + p["ch_b1"], 0.0)
    feat = jnp.maximum(c @ p["ch_w2"] + p["ch_b2"], 0.0)
    policy = feat @ p["pol_w"] + p["pol_b"]
    value = feat @ p["val_w"] + p["val_b"]
    relevance = jax.nn.sigmoid(text_embeds @ p["rel_w"] + p["rel_b"])
    return policy, value, relevance


if __name__ == "__main__":
    key = jax.random.PRNGKey(0)
    k_text, k_state, k_param = jax.random.split(key, 3)

    B = 2            # batch (number of texts / states)
    STATE_SIZE = 32  # state_size
    ACTION_SIZE = 8  # action_size

    # text_embeds stands in for DistilBERT last_hidden_state.mean(dim=1)
    text_embeds = jax.random.normal(k_text, (B, TEXT_DIM), dtype=jnp.float32)
    states = jax.random.normal(k_state, (B, STATE_SIZE), dtype=jnp.float32)
    params = init_params(k_param, STATE_SIZE, ACTION_SIZE)
    packed = pack_params(params, ACTION_SIZE)

    policy, value, relevance = advanced_gaming_net_forward(
        text_embeds, states, packed, ACTION_SIZE
    )
    jax.block_until_ready((policy, value, relevance))

    # correctness check against pure-JAX f32 reference (bf16 weights -> loose tol)
    ref_policy, ref_value, ref_relev = _reference_forward(text_embeds, states, params)
    assert policy.shape == (B, ACTION_SIZE)
    assert value.shape == (B, 1)
    assert relevance.shape == (B, 1)
    assert jnp.allclose(policy, ref_policy, atol=2e-2, rtol=2e-2)
    assert jnp.allclose(value, ref_value, atol=2e-2, rtol=2e-2)
    assert jnp.allclose(relevance, ref_relev, atol=2e-2, rtol=2e-2)

    print("KERNEL_OK")
</pallas_src>

<mosaic_0001>
module attributes {stable_mosaic.version = 11 : i64} {
  func.func @_gaming_net_kernel(%arg0: i32, %arg1: memref<8x768xbf16, #tpu.memory_space<vmem>>, %arg2: memref<8x32xbf16, #tpu.memory_space<vmem>>, %arg3: memref<32x128xbf16, #tpu.memory_space<vmem>>, %arg4: memref<1x128xf32, #tpu.memory_space<vmem>>, %arg5: memref<128x64xbf16, #tpu.memory_space<vmem>>, %arg6: memref<1x64xf32, #tpu.memory_space<vmem>>, %arg7: memref<768x384xbf16, #tpu.memory_space<vmem>>, %arg8: memref<64x384xbf16, #tpu.memory_space<vmem>>, %arg9: memref<1x384xf32, #tpu.memory_space<vmem>>, %arg10: memref<256x128xbf16, #tpu.memory_space<vmem>>, %arg11: memref<1x128xf32, #tpu.memory_space<vmem>>, %arg12: memref<128x128xbf16, #tpu.memory_space<vmem>>, %arg13: memref<1x128xf32, #tpu.memory_space<vmem>>, %arg14: memref<8x256xf32, #tpu.memory_space<vmem>>) attributes {dimension_semantics = [#tpu.dimension_semantics<parallel>], iteration_bounds = array<i64: 1>, scalar_prefetch = 0 : i64, scratch_operands = 0 : i64, tpu.core_type = #tpu.core_type<tc>, window_params = [{transform_indices = @transform_0, window_bounds = array<i64: 8, 768>}, {transform_indices = @transform_1, window_bounds = array<i64: 8, 32>}, {pipeline_mode = #tpu.pipeline_mode<synchronous>, transform_indices = @transform_2, window_bounds = array<i64: 32, 128>}, {pipeline_mode = #tpu.pipeline_mode<synchronous>, transform_indices = @transform_3, window_bounds = array<i64: 1, 128>}, {pipeline_mode = #tpu.pipeline_mode<synchronous>, transform_indices = @transform_4, window_bounds = array<i64: 128, 64>}, {pipeline_mode = #tpu.pipeline_mode<synchronous>, transform_indices = @transform_5, window_bounds = array<i64: 1, 64>}, {pipeline_mode = #tpu.pipeline_mode<synchronous>, transform_indices = @transform_6, window_bounds = array<i64: 768, 384>}, {pipeline_mode = #tpu.pipeline_mode<synchronous>, transform_indices = @transform_7, window_bounds = array<i64: 64, 384>}, {pipeline_mode = #tpu.pipeline_mode<synchronous>, transform_indices = @transform_8, window_bounds = array<i64: 1, 384>}, {pipeline_mode = #tpu.pipeline_mode<synchronous>, transform_indices = @transform_9, window_bounds = array<i64: 256, 128>}, {pipeline_mode = #tpu.pipeline_mode<synchronous>, transform_indices = @transform_10, window_bounds = array<i64: 1, 128>}, {pipeline_mode = #tpu.pipeline_mode<synchronous>, transform_indices = @transform_11, window_bounds = array<i64: 128, 128>}, {pipeline_mode = #tpu.pipeline_mode<synchronous>, transform_indices = @transform_12, window_bounds = array<i64: 1, 128>}, {transform_indices = @transform_13, window_bounds = array<i64: 8, 256>}]} {
    %c0 = arith.constant 0 : index
    %c0_0 = arith.constant 0 : index
    %0 = vector.load %arg1[%c0, %c0_0] : memref<8x768xbf16, #tpu.memory_space<vmem>>, vector<8x768xbf16>
    %c0_1 = arith.constant 0 : index
    %c0_2 = arith.constant 0 : index
    %1 = vector.load %arg2[%c0_1, %c0_2] : memref<8x32xbf16, #tpu.memory_space<vmem>>, vector<8x32xbf16>
    %c0_3 = arith.constant 0 : index
    %c0_4 = arith.constant 0 : index
    %2 = vector.load %arg3[%c0_3, %c0_4] : memref<32x128xbf16, #tpu.memory_space<vmem>>, vector<32x128xbf16>
    %cst = arith.constant dense<0.000000e+00> : vector<8x128xf32>
    %3 = tpu.matmul %1, %2, %cst {dimension_numbers = #tpu.dot_dimension_numbers<[1], [0], [0], [1], [0, 0, 1, 1], [], []>} : vector<8x32xbf16>, vector<32x128xbf16>, vector<8x128xf32> -> vector<8x128xf32>
    %c0_5 = arith.constant 0 : index
    %c0_6 = arith.constant 0 : index
    %4 = vector.load %arg4[%c0_5, %c0_6] : memref<1x128xf32, #tpu.memory_space<vmem>>, vector<1x128xf32>
    %5 = vector.broadcast %4 : vector<1x128xf32> to vector<8x128xf32>
    %6 = arith.addf %3, %5 : vector<8x128xf32>
    %cst_7 = arith.constant 0.000000e+00 : f32
    %7 = vector.broadcast %cst_7 : f32 to vector<8x128xf32>
    %8 = arith.maximumf %6, %7 : vector<8x128xf32>
    %9 = arith.truncf %8 : vector<8x128xf32> to vector<8x128xbf16>
    %c0_8 = arith.constant 0 : index
    %c0_9 = arith.constant 0 : index
    %10 = vector.load %arg5[%c0_8, %c0_9] : memref<128x64xbf16, #tpu.memory_space<vmem>>, vector<128x64xbf16>
    %cst_10 = arith.constant dense<0.000000e+00> : vector<8x64xf32>
    %11 = tpu.matmul %9, %10, %cst_10 {dimension_numbers = #tpu.dot_dimension_numbers<[1], [0], [0], [1], [0, 0, 1, 1], [], []>} : vector<8x128xbf16>, vector<128x64xbf16>, vector<8x64xf32> -> vector<8x64xf32>
    %c0_11 = arith.constant 0 : index
    %c0_12 = arith.constant 0 : index
    %12 = vector.load %arg6[%c0_11, %c0_12] : memref<1x64xf32, #tpu.memory_space<vmem>>, vector<1x64xf32>
    %13 = vector.broadcast %12 : vector<1x64xf32> to vector<8x64xf32>
    %14 = arith.addf %11, %13 : vector<8x64xf32>
    %cst_13 = arith.constant 0.000000e+00 : f32
    %15 = vector.broadcast %cst_13 : f32 to vector<8x64xf32>
    %16 = arith.maximumf %14, %15 : vector<8x64xf32>
    %17 = arith.truncf %16 : vector<8x64xf32> to vector<8x64xbf16>
    %c0_14 = arith.constant 0 : index
    %c0_15 = arith.constant 0 : index
    %18 = vector.load %arg7[%c0_14, %c0_15] : memref<768x384xbf16, #tpu.memory_space<vmem>>, vector<768x384xbf16>
    %cst_16 = arith.constant dense<0.000000e+00> : vector<8x384xf32>
    %19 = tpu.matmul %0, %18, %cst_16 {dimension_numbers = #tpu.dot_dimension_numbers<[1], [0], [0], [1], [0, 0, 1, 1], [], []>} : vector<8x768xbf16>, vector<768x384xbf16>, vector<8x384xf32> -> vector<8x384xf32>
    %c0_17 = arith.constant 0 : index
    %c0_18 = arith.constant 0 : index
    %20 = vector.load %arg8[%c0_17, %c0_18] : memref<64x384xbf16, #tpu.memory_space<vmem>>, vector<64x384xbf16>
    %cst_19 = arith.constant dense<0.000000e+00> : vector<8x384xf32>
    %21 = tpu.matmul %17, %20, %cst_19 {dimension_numbers = #tpu.dot_dimension_numbers<[1], [0], [0], [1], [0, 0, 1, 1], [], []>} : vector<8x64xbf16>, vector<64x384xbf16>, vector<8x384xf32> -> vector<8x384xf32>
    %22 = arith.addf %19, %21 : vector<8x384xf32>
    %c0_20 = arith.constant 0 : index
    %c0_21 = arith.constant 0 : index
    %23 = vector.load %arg9[%c0_20, %c0_21] : memref<1x384xf32, #tpu.memory_space<vmem>>, vector<1x384xf32>
    %24 = vector.broadcast %23 : vector<1x384xf32> to vector<8x384xf32>
    %25 = arith.addf %22, %24 : vector<8x384xf32>
    %26 = vector.extract_strided_slice %25 {offsets = [0, 0], sizes = [8, 256], strides = [1, 1]} : vector<8x384xf32> to vector<8x256xf32>
    %cst_22 = arith.constant 0.000000e+00 : f32
    %27 = vector.broadcast %cst_22 : f32 to vector<8x256xf32>
    %28 = arith.maximumf %26, %27 : vector<8x256xf32>
    %29 = arith.truncf %28 : vector<8x256xf32> to vector<8x256xbf16>
    %30 = vector.extract_strided_slice %25 {offsets = [0, 256], sizes = [8, 128], strides = [1, 1]} : vector<8x384xf32> to vector<8x128xf32>
    %31 = arith.negf %30 : vector<8x128xf32>
    %32 = math.exp %31 : vector<8x128xf32>
    %cst_23 = arith.constant 1.000000e+00 : f32
    %33 = vector.broadcast %cst_23 : f32 to vector<8x128xf32>
    %34 = arith.addf %33, %32 : vector<8x128xf32>
    %35 = arith.divf %33, %34 : vector<8x128xf32>
    %c0_24 = arith.constant 0 : index
    %c0_25 = arith.constant 0 : index
    %36 = vector.load %arg10[%c0_24, %c0_25] : memref<256x128xbf16, #tpu.memory_space<vmem>>, vector<256x128xbf16>
    %cst_26 = arith.constant dense<0.000000e+00> : vector<8x128xf32>
    %37 = tpu.matmul %29, %36, %cst_26 {dimension_numbers = #tpu.dot_dimension_numbers<[1], [0], [0], [1], [0, 0, 1, 1], [], []>} : vector<8x256xbf16>, vector<256x128xbf16>, vector<8x128xf32> -> vector<8x128xf32>
    %c0_27 = arith.constant 0 : index
    %c0_28 = arith.constant 0 : index
    %38 = vector.load %arg11[%c0_27, %c0_28] : memref<1x128xf32, #tpu.memory_space<vmem>>, vector<1x128xf32>
    %39 = vector.broadcast %38 : vector<1x128xf32> to vector<8x128xf32>
    %40 = arith.addf %37, %39 : vector<8x128xf32>
    %cst_29 = arith.constant 0.000000e+00 : f32
    %41 = vector.broadcast %cst_29 : f32 to vector<8x128xf32>
    %42 = arith.maximumf %40, %41 : vector<8x128xf32>
    %43 = arith.truncf %42 : vector<8x128xf32> to vector<8x128xbf16>
    %c0_30 = arith.constant 0 : index
    %c0_31 = arith.constant 0 : index
    %44 = vector.load %arg12[%c0_30, %c0_31] : memref<128x128xbf16, #tpu.memory_space<vmem>>, vector<128x128xbf16>
    %cst_32 = arith.constant dense<0.000000e+00> : vector<8x128xf32>
    %45 = tpu.matmul %43, %44, %cst_32 {dimension_numbers = #tpu.dot_dimension_numbers<[1], [0], [0], [1], [0, 0, 1, 1], [], []>} : vector<8x128xbf16>, vector<128x128xbf16>, vector<8x128xf32> -> vector<8x128xf32>
    %c0_33 = arith.constant 0 : index
    %c0_34 = arith.constant 0 : index
    %46 = vector.load %arg13[%c0_33, %c0_34] : memref<1x128xf32, #tpu.memory_space<vmem>>, vector<1x128xf32>
    %47 = vector.broadcast %46 : vector<1x128xf32> to vector<8x128xf32>
    %48 = arith.addf %45, %47 : vector<8x128xf32>
    %c0_35 = arith.constant 0 : index
    %c0_36 = arith.constant 0 : index
    %49 = vector.load %arg14[%c0_35, %c0_36] : memref<8x256xf32, #tpu.memory_space<vmem>>, vector<8x128xf32>
    tpu.vector_store %arg14[%c0_35, %c0_36], %48 {strides = array<i32>} : memref<8x256xf32, #tpu.memory_space<vmem>>, vector<8x128xf32>,
    %c0_37 = arith.constant 0 : index
    %c128 = arith.constant 128 : index
    %50 = vector.load %arg14[%c0_37, %c128] : memref<8x256xf32, #tpu.memory_space<vmem>>, vector<8x128xf32>
    tpu.vector_store %arg14[%c0_37, %c128], %35 {strides = array<i32>} : memref<8x256xf32, #tpu.memory_space<vmem>>, vector<8x128xf32>,
    return
  }
  func.func @transform_0(%arg0: i32) -> (i32, i32) {
    %c0_i32 = arith.constant 0 : i32
    %c0_i32_0 = arith.constant 0 : i32
    return %arg0, %c0_i32 : i32, i32
  }
  func.func @transform_1(%arg0: i32) -> (i32, i32) {
    %c0_i32 = arith.constant 0 : i32
    %c0_i32_0 = arith.constant 0 : i32
    return %arg0, %c0_i32 : i32, i32
  }
  func.func @transform_2(%arg0: i32) -> (i32, i32) {
    %c0_i32 = arith.constant 0 : i32
    %c0_i32_0 = arith.constant 0 : i32
    %c0_i32_1 = arith.constant 0 : i32
    return %c0_i32, %c0_i32_0 : i32, i32
  }
  func.func @transform_3(%arg0: i32) -> (i32, i32) {
    %c0_i32 = arith.constant 0 : i32
    %c0_i32_0 = arith.constant 0 : i32
    %c0_i32_1 = arith.constant 0 : i32
    return %c0_i32, %c0_i32_0 : i32, i32
  }
  func.func @transform_4(%arg0: i32) -> (i32, i32) {
    %c0_i32 = arith.constant 0 : i32
    %c0_i32_0 = arith.constant 0 : i32
    %c0_i32_1 = arith.constant 0 : i32
    return %c0_i32, %c0_i32_0 : i32, i32
  }
  func.func @transform_5(%arg0: i32) -> (i32, i32) {
    %c0_i32 = arith.constant 0 : i32
    %c0_i32_0 = arith.constant 0 : i32
    %c0_i32_1 = arith.constant 0 : i32
    return %c0_i32, %c0_i32_0 : i32, i32
  }
  func.func @transform_6(%arg0: i32) -> (i32, i32) {
    %c0_i32 = arith.constant 0 : i32
    %c0_i32_0 = arith.constant 0 : i32
    %c0_i32_1 = arith.constant 0 : i32
    return %c0_i32, %c0_i32_0 : i32, i32
  }
  func.func @transform_7(%arg0: i32) -> (i32, i32) {
    %c0_i32 = arith.constant 0 : i32
    %c0_i32_0 = arith.constant 0 : i32
    %c0_i32_1 = arith.constant 0 : i32
    return %c0_i32, %c0_i32_0 : i32, i32
  }
  func.func @transform_8(%arg0: i32) -> (i32, i32) {
    %c0_i32 = arith.constant 0 : i32
    %c0_i32_0 = arith.constant 0 : i32
    %c0_i32_1 = arith.constant 0 : i32
    return %c0_i32, %c0_i32_0 : i32, i32
  }
  func.func @transform_9(%arg0: i32) -> (i32, i32) {
    %c0_i32 = arith.constant 0 : i32
    %c0_i32_0 = arith.constant 0 : i32
    %c0_i32_1 = arith.constant 0 : i32
    return %c0_i32, %c0_i32_0 : i32, i32
  }
  func.func @transform_10(%arg0: i32) -> (i32, i32) {
    %c0_i32 = arith.constant 0 : i32
    %c0_i32_0 = arith.constant 0 : i32
    %c0_i32_1 = arith.constant 0 : i32
    return %c0_i32, %c0_i32_0 : i32, i32
  }
  func.func @transform_11(%arg0: i32) -> (i32, i32) {
    %c0_i32 = arith.constant 0 : i32
    %c0_i32_0 = arith.constant 0 : i32
    %c0_i32_1 = arith.constant 0 : i32
    return %c0_i32, %c0_i32_0 : i32, i32
  }
  func.func @transform_12(%arg0: i32) -> (i32, i32) {
    %c0_i32 = arith.constant 0 : i32
    %c0_i32_0 = arith.constant 0 : i32
    %c0_i32_1 = arith.constant 0 : i32
    return %c0_i32, %c0_i32_0 : i32, i32
  }
  func.func @transform_13(%arg0: i32) -> (i32, i32) {
    %c0_i32 = arith.constant 0 : i32
    %c0_i32_0 = arith.constant 0 : i32
    return %arg0, %c0_i32 : i32, i32
  }
}

</mosaic_0001>

<llo_original>
// kernel: tpu_custom_call.1
$region0: #{tpu_custom_call.1}
  #allocation0 [shape = 'u32[]', space=smem, size = 0x4, offset = 0x4, fixed_abs, tag = 'smem constant byte address 0x4 - core index']
  #allocation1 [shape = 'u32[144,128]{1,0:T(1,128)}', space=vmem, size = 0x12000, scoped, tag = 'internal scratch']
  %s0 = inlined_call_operand.hbm [shape: bf16[8,768], index: 0, kind: input, shape index: {}]
  %s1 = inlined_call_operand.vmem [shape: bf16[8,32], index: 1, kind: input, shape index: {}]
  %s2 = inlined_call_operand.hbm [shape: bf16[32,128], index: 2, kind: input, shape index: {}]
  %s3 = inlined_call_operand.vmem [shape: f32[1,128], index: 3, kind: input, shape index: {}]
  %s4 = inlined_call_operand.vmem [shape: bf16[128,64], index: 4, kind: input, shape index: {}]
  %s5 = inlined_call_operand.vmem [shape: f32[1,64], index: 5, kind: input, shape index: {}]
  %s6 = inlined_call_operand.hbm [shape: bf16[768,384], index: 6, kind: input, shape index: {}]
  %s7 = inlined_call_operand.vmem [shape: bf16[64,384], index: 7, kind: input, shape index: {}]
  %s8 = inlined_call_operand.vmem [shape: f32[1,384], index: 8, kind: input, shape index: {}]
  %s9 = inlined_call_operand.hbm [shape: bf16[256,128], index: 9, kind: input, shape index: {}]
  %s10 = inlined_call_operand.vmem [shape: f32[1,128], index: 10, kind: input, shape index: {}]
  %s11 = inlined_call_operand.hbm [shape: bf16[128,128], index: 11, kind: input, shape index: {}]
  %s12 = inlined_call_operand.vmem [shape: f32[1,128], index: 12, kind: input, shape index: {}]
  %s13 = inlined_call_operand.hbm [shape: f32[8,256], index: 13, kind: output, shape index: {}]
  %s14 = sld [smem:[#allocation0]]
  $region82: #{tpu_custom_call.1} parent=0
    _
  %s16 = ssub.s32 1, %s14
  %s17 = scalar_select 0, %s16, %s14
  $region1: #{tpu_custom_call.1} parent=0
    #allocation2 [shape = 'u8[12288]{0}', space=vmem, size = 0x3000, scoped, tag = 'input window, operand 0, single buffered']
    #allocation3 [shape = 's32[1]{0}', space=sflag, size = 0x4, scoped, tag = 'scoped memory for tpu_custom_call.1']
    #allocation4 [shape = 's32[1]{0}', space=sflag, size = 0x4, scoped, tag = 'scoped memory for tpu_custom_call.1']
    #allocation5 [shape = 'u8[8192]{0}', space=vmem, size = 0x2000, scoped, tag = 'input window, operand 2, single buffered']
    #allocation6 [shape = 's32[1]{0}', space=sflag, size = 0x4, scoped, tag = 'scoped memory for tpu_custom_call.1']
    #allocation7 [shape = 'u8[589824]{0}', space=vmem, size = 0x90000, scoped, tag = 'input window, operand 6, single buffered']
    #allocation8 [shape = 'u8[65536]{0}', space=vmem, size = 0x10000, scoped, tag = 'input window, operand 9, single buffered']
    #allocation9 [shape = 's32[1]{0}', space=sflag, size = 0x4, scoped, tag = 'scoped memory for tpu_custom_call.1']
    #allocation10 [shape = 'u8[32768]{0}', space=vmem, size = 0x8000, scoped, tag = 'input window, operand 11, single buffered']
    #allocation11 [shape = 'u8[8192]{0}', space=vmem, size = 0x2000, scoped, tag = 'output window, operand 0, single buffered']
    %18 = vsyncpa [#allocation3], 0
    %19 = vsyncpa [#allocation6], 0
    %20 = vsyncpa [#allocation9], 0
    %21 = vsyncpa [#allocation4], 0
    // Predicated region
    $region2: #{tpu_custom_call.1} parent=1 // pred_check
      _
    $region3: #{tpu_custom_call.1} parent=1 // pred_check_branch
      %23 = sbr.rel (0) target = $region5
    $region4: #{tpu_custom_call.1} parent=1 // pred_region
      %s25 = ssub.s32 384, 384
      %26 = vsyncadd [#allocation3], %s25
      %s28 = sshll.u32 [#allocation2], 4
      %s29 = int_to_ptr.vmem [resolvable:$true] %s28
      %31 = dma.hbm_to_vmem [thread:$0]  %s0, 384, %s29, [#allocation3]
    $region5: #{tpu_custom_call.1} parent=1 // pred_fallthru
      _
    // Predicated region
    $region6: #{tpu_custom_call.1} parent=1 // pred_check
      _
    $region7: #{tpu_custom_call.1} parent=1 // pred_check_branch
      %33 = sbr.rel (0) target = $region9
    $region8: #{tpu_custom_call.1} parent=1 // pred_region
      _
    $region9: #{tpu_custom_call.1} parent=1 // pred_fallthru
      _
    // Predicated region
    $region10: #{tpu_custom_call.1} parent=1 // pred_check
      _
    $region11: #{tpu_custom_call.1} parent=1 // pred_check_branch
      %35 = sbr.rel (0) target = $region13
    $region12: #{tpu_custom_call.1} parent=1 // pred_region
      %s37 = ssub.s32 256, 256
      %38 = vsyncadd [#allocation6], %s37
      %s39 = sshll.u32 [#allocation5], 4
      %s40 = int_to_ptr.vmem [resolvable:$true] %s39
      %45 = dma.hbm_to_vmem [thread:$0]  %s2, 256, %s40, [#allocation6], 64, 64, 4
    $region13: #{tpu_custom_call.1} parent=1 // pred_fallthru
      _
    // Predicated region
    $region14: #{tpu_custom_call.1} parent=1 // pred_check
      _
    $region15: #{tpu_custom_call.1} parent=1 // pred_check_branch
      %47 = sbr.rel (0) target = $region17
    $region16: #{tpu_custom_call.1} parent=1 // pred_region
      _
    $region17: #{tpu_custom_call.1} parent=1 // pred_fallthru
      _
    // Predicated region
    $region18: #{tpu_custom_call.1} parent=1 // pred_check
      _
    $region19: #{tpu_custom_call.1} parent=1 // pred_check_branch
      %49 = sbr.rel (0) target = $region21
    $region20: #{tpu_custom_call.1} parent=1 // pred_region
      _
    $region21: #{tpu_custom_call.1} parent=1 // pred_fallthru
      _
    // Predicated region
    $region22: #{tpu_custom_call.1} parent=1 // pred_check
      _
    $region23: #{tpu_custom_call.1} parent=1 // pred_check_branch
      %51 = sbr.rel (0) target = $region25
    $region24: #{tpu_custom_call.1} parent=1 // pred_region
      _
    $region25: #{tpu_custom_call.1} parent=1 // pred_fallthru
      _
    // Predicated region
    $region26: #{tpu_custom_call.1} parent=1 // pred_check
      _
    $region27: #{tpu_custom_call.1} parent=1 // pred_check_branch
      %53 = sbr.rel (0) target = $region29
    $region28: #{tpu_custom_call.1} parent=1 // pred_region
      %s55 = ssub.s32 18432, 18432
      %56 = vsyncadd [#allocation6], %s55
      %s57 = sshll.u32 [#allocation7], 4
      %s58 = int_to_ptr.vmem [resolvable:$true] %s57
      %63 = dma.hbm_to_vmem [thread:$0]  %s6, 18432, %s58, [#allocation6], 192, 192, 12
    $region29: #{tpu_custom_call.1} parent=1 // pred_fallthru
      _
    // Predicated region
    $region30: #{tpu_custom_call.1} parent=1 // pred_check
      _
    $region31: #{tpu_custom_call.1} parent=1 // pred_check_branch
      %65 = sbr.rel (0) target = $region33
    $region32: #{tpu_custom_call.1} parent=1 // pred_region
      _
    $region33: #{tpu_custom_call.1} parent=1 // pred_fallthru
      _
    // Predicated region
    $region34: #{tpu_custom_call.1} parent=1 // pred_check
      _
    $region35: #{tpu_custom_call.1} parent=1 // pred_check_branch
      %67 = sbr.rel (0) target = $region37
    $region36: #{tpu_custom_call.1} parent=1 // pred_region
      _
    $region37: #{tpu_custom_call.1} parent=1 // pred_fallthru
      _
    // Predicated region
    $region38: #{tpu_custom_call.1} parent=1 // pred_check
      _
    $region39: #{tpu_custom_call.1} parent=1 // pred_check_branch
      %69 = sbr.rel (0) target = $region41
    $region40: #{tpu_custom_call.1} parent=1 // pred_region
      %s71 = ssub.s32 2048, 2048
      %72 = vsyncadd [#allocation9], %s71
      %s73 = sshll.u32 [#allocation8], 4
      %s74 = int_to_ptr.vmem [resolvable:$true] %s73
      %79 = dma.hbm_to_vmem [thread:$0]  %s9, 2048, %s74, [#allocation9], 64, 64, 4
    $region41: #{tpu_custom_call.1} parent=1 // pred_fallthru
      _
    // Predicated region
    $region42: #{tpu_custom_call.1} parent=1 // pred_check
      _
    $region43: #{tpu_custom_call.1} parent=1 // pred_check_branch
      %81 = sbr.rel (0) target = $region45
    $region44: #{tpu_custom_call.1} parent=1 // pred_region
      _
    $region45: #{tpu_custom_call.1} parent=1 // pred_fallthru
      _
    // Predicated region
    $region46: #{tpu_custom_call.1} parent=1 // pred_check
      _
    $region47: #{tpu_custom_call.1} parent=1 // pred_check_branch
      %83 = sbr.rel (0) target = $region49
    $region48: #{tpu_custom_call.1} parent=1 // pred_region
      %s85 = ssub.s32 1024, 1024
      %86 = vsyncadd [#allocation9], %s85
      %s87 = sshll.u32 [#allocation10], 4
      %s88 = int_to_ptr.vmem [resolvable:$true] %s87
      %93 = dma.hbm_to_vmem [thread:$0]  %s11, 1024, %s88, [#allocation9], 64, 64, 4
    $region49: #{tpu_custom_call.1} parent=1 // pred_fallthru
      _
    // Predicated region
    $region50: #{tpu_custom_call.1} parent=1 // pred_check
      _
    $region51: #{tpu_custom_call.1} parent=1 // pred_check_branch
      %95 = sbr.rel (0) target = $region53
    $region52: #{tpu_custom_call.1} parent=1 // pred_region
      _
    $region53: #{tpu_custom_call.1} parent=1 // pred_fallthru
      _
    // Predicated region
    $region54: #{tpu_custom_call.1} parent=1 // pred_check
      _
    $region55: #{tpu_custom_call.1} parent=1 // pred_check_branch
      %97 = sbr.rel (0) target = $region57
    $region56: #{tpu_custom_call.1} parent=1 // pred_region
      %98 = dma.done [#allocation3], 384
    $region57: #{tpu_custom_call.1} parent=1 // pred_fallthru
      _
    // Predicated region
    $region58: #{tpu_custom_call.1} parent=1 // pred_check
      _
    $region59: #{tpu_custom_call.1} parent=1 // pred_check_branch
      %100 = sbr.rel (0) target = $region61
    $region60: #{tpu_custom_call.1} parent=1 // pred_region
      %101 = dma.done [#allocation6], 256
    $region61: #{tpu_custom_call.1} parent=1 // pred_fallthru
      _
    // Predicated region
    $region62: #{tpu_custom_call.1} parent=1 // pred_check
      _
    $region63: #{tpu_custom_call.1} parent=1 // pred_check_branch
      %103 = sbr.rel (0) target = $region65
    $region64: #{tpu_custom_call.1} parent=1 // pred_region
      %104 = dma.done [#allocation6], 18432
    $region65: #{tpu_custom_call.1} parent=1 // pred_fallthru
      _
    // Predicated region
    $region66: #{tpu_custom_call.1} parent=1 // pred_check
      _
    $region67: #{tpu_custom_call.1} parent=1 // pred_check_branch
      %106 = sbr.rel (0) target = $region69
    $region68: #{tpu_custom_call.1} parent=1 // pred_region
      %107 = dma.done [#allocation9], 2048
    $region69: #{tpu_custom_call.1} parent=1 // pred_fallthru
      _
    // Predicated region
    $region70: #{tpu_custom_call.1} parent=1 // pred_check
      _
    $region71: #{tpu_custom_call.1} parent=1 // pred_check_branch
      %109 = sbr.rel (0) target = $region73
    $region72: #{tpu_custom_call.1} parent=1 // pred_region
      %110 = dma.done [#allocation9], 1024
    $region73: #{tpu_custom_call.1} parent=1 // pred_fallthru
      _
    %v112 = vld [vmem:[#allocation2] sm:$0xff]
    %v113 = vld [vmem:[#allocation2 + $0x8] sm:$0xff]
    %v114 = vld [vmem:[#allocation2 + $0x10] sm:$0xff]
    %v115 = vld [vmem:[%s1] sm:$0xf]
    %v116 = vld [vmem:[#allocation5] sm:$0xf]
    %v117 = vld [vmem:[#allocation5 + $0x4] sm:$0xf]
    %v118 = vld [vmem:[#allocation5 + $0x8] sm:$0xf]
    %v119 = vld [vmem:[#allocation5 + $0xc] sm:$0xf]
    %v120 = vld [vmem:[%s3] sm:$0x1]
    %v122 = vlaneseq
    %v123 = vshrl.u32 %v122, 7
    %v124 = vsub.s32 0, %v123
    %v125 = vrot.slane %v120, %v124
    %v131 = vunpack.c.l.b16 %v116
    %v132 = vunpack.c.l.b16 %v117
    %v133 = vunpack.c.l.b16 %v118
    %v134 = vunpack.c.l.b16 %v119
    %v135 = vpack.c.b16 %v132, %v131
    %v136 = vpack.c.b16 %v134, %v133
    %vm139 = vcmask 261120
    %v141 = vsel %vm139, %v115, 0
    %143 = vmatprep.subr.bf16.mxu0 0
    %144 = vmatpush1.bf16.msra.mxu0 0
    %145 = vmatprep.subr.bf16.mxu0 0
    %146 = vmatpush1.bf16.msra.mxu0 0
    %147 = vmatprep.subr.bf16.mxu0 0
    %148 = vmatpush1.bf16.msra.mxu0 0
    %149 = vmatprep.subr.bf16.mxu0 0
    %150 = vmatpush1.bf16.msra.mxu0 0
    %151 = vmatprep.subr.bf16.mxu0 0
    %152 = vmatpush1.bf16.msra.mxu0 0
    %153 = vmatprep.subr.bf16.mxu0 0
    %154 = vmatpush1.bf16.msra.mxu0 0
    %155 = vmatprep.subr.bf16.mxu0 0
    %156 = vmatpush1.bf16.msra.mxu0 %v136
    %157 = vmatprep.subr.bf16.mxu0 0
    %158 = vmatpush1.bf16.msra.mxu0 %v135
    %159 = vmatprep.subr.bf16.mxu0 0
    %160 = vmatpush2.bf16.msra.mxu0 0
    %161 = vmatprep.subr.bf16.mxu0 0
    %162 = vmatpush2.bf16.msra.mxu0 0
    %163 = vmatprep.subr.bf16.mxu0 0
    %164 = vmatpush2.bf16.msra.mxu0 0
    %165 = vmatprep.subr.bf16.mxu0 0
    %166 = vmatpush2.bf16.msra.mxu0 0
    %167 = vmatprep.subr.bf16.mxu0 0
    %168 = vmatpush2.bf16.msra.mxu0 0
    %169 = vmatprep.subr.bf16.mxu0 0
    %170 = vmatpush2.bf16.msra.mxu0 0
    %171 = vmatprep.subr.bf16.mxu0 0
    %172 = vmatpush2.bf16.msra.mxu0 0
    %173 = vmatprep.subr.bf16.mxu0 0
    %174 = vmatpush2.bf16.msra.mxu0 0
    %175 = vmatprep.mubr.bf16.mxu0 0
    %176 = vmatmul.mubr.bf16.gmra.mxu0 %v141
    %v177 = vpop.f32.mrf.mxu0
    %v178 = vadd.f32 %v125, %v177
    %v179 = vpop.f32.mrf.mxu0
    %v180 = vpop.f32.mrf.mxu0
    %v181 = vpop.f32.mrf.mxu0
    %182 = vdwg.mxu0
    %v183 = vmax.f32 %v178, 0.0
    %v184 = vpack.c.bf16 %v183, %v183
    %v185 = vld [vmem:[%s4] sm:$0xf]
    %v186 = vld [vmem:[%s4 + $0x4] sm:$0xf]
    %v187 = vld [vmem:[%s4 + $0x8] sm:$0xf]
    %v188 = vld [vmem:[%s4 + $0xc] sm:$0xf]
    %v189 = vld [vmem:[%s4 + $0x10] sm:$0xf]
    %v190 = vld [vmem:[%s4 + $0x14] sm:$0xf]
    %v191 = vld [vmem:[%s4 + $0x18] sm:$0xf]
    %v192 = vld [vmem:[%s4 + $0x1c] sm:$0xf]
    %v193 = vld [vmem:[%s4 + $0x20] sm:$0xf]
    %v194 = vld [vmem:[%s4 + $0x24] sm:$0xf]
    %v195 = vld [vmem:[%s4 + $0x28] sm:$0xf]
    %v196 = vld [vmem:[%s4 + $0x2c] sm:$0xf]
    %v197 = vld [vmem:[%s4 + $0x30] sm:$0xf]
    %v198 = vld [vmem:[%s4 + $0x34] sm:$0xf]
    %v199 = vld [vmem:[%s4 + $0x38] sm:$0xf]
    %v200 = vld [vmem:[%s4 + $0x3c] sm:$0xf]
    %v201 = vld [vmem:[%s5] sm:$0x1]
    %v203 = vlaneseq
    %v204 = vshrl.u32 %v203, 7
    %v205 = vsub.s32 0, %v204
    %v206 = vrot.slane %v201, %v205
    %v224 = vunpack.c.l.b16 %v185
    %v225 = vunpack.c.l.b16 %v186
    %v226 = vunpack.c.l.b16 %v187
    %v227 = vunpack.c.l.b16 %v188
    %v228 = vunpack.c.l.b16 %v189
    %v229 = vunpack.c.l.b16 %v190
    %v230 = vunpack.c.l.b16 %v191
    %v231 = vunpack.c.l.b16 %v192
    %v232 = vunpack.c.l.b16 %v193
    %v233 = vunpack.c.l.b16 %v194
    %v234 = vunpack.c.l.b16 %v195
    %v235 = vunpack.c.l.b16 %v196
    %v236 = vunpack.c.l.b16 %v197
    %v237 = vunpack.c.l.b16 %v198
    %v238 = vunpack.c.l.b16 %v199
    %v239 = vunpack.c.l.b16 %v200
    %v240 = vpack.c.b16 %v225, %v224
    %v241 = vpack.c.b16 %v227, %v226
    %v242 = vpack.c.b16 %v229, %v228
    %v243 = vpack.c.b16 %v231, %v230
    %v244 = vpack.c.b16 %v233, %v232
    %v245 = vpack.c.b16 %v235, %v234
    %v246 = vpack.c.b16 %v237, %v236
    %v247 = vpack.c.b16 %v239, %v238
    %256 = vmatprep.subr.bf16.mxu0 0
    %257 = vmatpush1.bf16.msra.mxu0 %v247
    %258 = vmatprep.subr.bf16.mxu0 0
    %259 = vmatpush1.bf16.msra.mxu0 %v246
    %260 = vmatprep.subr.bf16.mxu0 0
    %261 = vmatpush1.bf16.msra.mxu0 %v245
    %262 = vmatprep.subr.bf16.mxu0 0
    %263 = vmatpush1.bf16.msra.mxu0 %v244
    %264 = vmatprep.subr.bf16.mxu0 0
    %265 = vmatpush1.bf16.msra.mxu0 %v243
    %266 = vmatprep.subr.bf16.mxu0 0
    %267 = vmatpush1.bf16.msra.mxu0 %v242
    %268 = vmatprep.subr.bf16.mxu0 0
    %269 = vmatpush1.bf16.msra.mxu0 %v241
    %270 = vmatprep.subr.bf16.mxu0 0
    %271 = vmatpush1.bf16.msra.mxu0 %v240
    %272 = vmatprep.subr.bf16.mxu0 0
    %273 = vmatpush2.bf16.msra.mxu0 0
    %274 = vmatprep.subr.bf16.mxu0 0
    %275 = vmatpush2.bf16.msra.mxu0 0
    %276 = vmatprep.subr.bf16.mxu0 0
    %277 = vmatpush2.bf16.msra.mxu0 0
    %278 = vmatprep.subr.bf16.mxu0 0
    %279 = vmatpush2.bf16.msra.mxu0 0
    %280 = vmatprep.subr.bf16.mxu0 0
    %281 = vmatpush2.bf16.msra.mxu0 0
    %282 = vmatprep.subr.bf16.mxu0 0
    %283 = vmatpush2.bf16.msra.mxu0 0
    %284 = vmatprep.subr.bf16.mxu0 0
    %285 = vmatpush2.bf16.msra.mxu0 0
    %286 = vmatprep.subr.bf16.mxu0 0
    %287 = vmatpush2.bf16.msra.mxu0 0
    %288 = vmatprep.mubr.bf16.mxu0 0
    %289 = vmatmul.mubr.bf16.gmra.mxu0 %v184
    %v290 = vpop.f32.mrf.mxu0
    %v291 = vadd.f32 %v206, %v290
    %v292 = vpop.f32.mrf.mxu0
    %v293 = vpop.f32.mrf.mxu0
    %v294 = vpop.f32.mrf.mxu0
    %295 = vdwg.mxu0
    %v296 = vmax.f32 %v291, 0.0
    %v297 = vpack.c.bf16 %v296, %v296
    %v298 = vld [vmem:[#allocation7] sm:$0xff]
    %v299 = vld [vmem:[#allocation7 + $0x8] sm:$0xf]
    %v300 = vld [vmem:[#allocation7 + $0xc] sm:$0xff]
    %v301 = vld [vmem:[#allocation7 + $0x14] sm:$0xf]
    %v302 = vld [vmem:[#allocation7 + $0x18] sm:$0xff]
    %v303 = vld [vmem:[#allocation7 + $0x20] sm:$0xf]
    %v304 = vld [vmem:[#allocation7 + $0x24] sm:$0xff]
    %v305 = vld [vmem:[#allocation7 + $0x2c] sm:$0xf]
    %v306 = vld [vmem:[#allocation7 + $0x30] sm:$0xff]
    %v307 = vld [vmem:[#allocation7 + $0x38] sm:$0xf]
    %v308 = vld [vmem:[#allocation7 + $0x3c] sm:$0xff]
    %v309 = vld [vmem:[#allocation7 + $0x44] sm:$0xf]
    %v310 = vld [vmem:[#allocation7 + $0x48] sm:$0xff]
    %v311 = vld [vmem:[#allocation7 + $0x50] sm:$0xf]
    %v312 = vld [vmem:[#allocation7 + $0x54] sm:$0xff]
    %v313 = vld [vmem:[#allocation7 + $0x5c] sm:$0xf]
    %v314 = vld [vmem:[#allocation7 + $0x60] sm:$0xff]
    %v315 = vld [vmem:[#allocation7 + $0x68] sm:$0xf]
    %v316 = vld [vmem:[#allocation7 + $0x6c] sm:$0xff]
    %v317 = vld [vmem:[#allocation7 + $0x74] sm:$0xf]
    %v318 = vld [vmem:[#allocation7 + $0x78] sm:$0xff]
    %v319 = vld [vmem:[#allocation7 + $0x80] sm:$0xf]
    %v320 = vld [vmem:[#allocation7 + $0x84] sm:$0xff]
    %v321 = vld [vmem:[#allocation7 + $0x8c] sm:$0xf]
    %v322 = vld [vmem:[#allocation7 + $0x90] sm:$0xff]
    %v323 = vld [vmem:[#allocation7 + $0x98] sm:$0xf]
    %v324 = vld [vmem:[#allocation7 + $0x9c] sm:$0xff]
    %v325 = vld [vmem:[#allocation7 + $0xa4] sm:$0xf]
    %v326 = vld [vmem:[#allocation7 + $0xa8] sm:$0xff]
    %v327 = vld [vmem:[#allocation7 + $0xb0] sm:$0xf]
    %v328 = vld [vmem:[#allocation7 + $0xb4] sm:$0xff]
    %v329 = vld [vmem:[#allocation7 + $0xbc] sm:$0xf]
    %v330 = vld [vmem:[#allocation7 + $0xc0] sm:$0xff]
    %v331 = vld [vmem:[#allocation7 + $0xc8] sm:$0xf]
    %v332 = vld [vmem:[#allocation7 + $0xcc] sm:$0xff]
    %v333 = vld [vmem:[#allocation7 + $0xd4] sm:$0xf]
    %v334 = vld [vmem:[#allocation7 + $0xd8] sm:$0xff]
    %v335 = vld [vmem:[#allocation7 + $0xe0] sm:$0xf]
    %v336 = vld [vmem:[#allocation7 + $0xe4] sm:$0xff]
    %v337 = vld [vmem:[#allocation7 + $0xec] sm:$0xf]
    %v338 = vld [vmem:[#allocation7 + $0xf0] sm:$0xff]
    %v339 = vld [vmem:[#allocation7 + $0xf8] sm:$0xf]
    %v340 = vld [vmem:[#allocation7 + $0xfc] sm:$0xff]
    %v341 = vld [vmem:[#allocation7 + $0x104] sm:$0xf]
    %v342 = vld [vmem:[#allocation7 + $0x108] sm:$0xff]
    %v343 = vld [vmem:[#allocation7 + $0x110] sm:$0xf]
    %v344 = vld [vmem:[#allocation7 + $0x114] sm:$0xff]
    %v345 = vld [vmem:[#allocation7 + $0x11c] sm:$0xf]
    %v346 = vld [vmem:[#allocation7 + $0x120] sm:$0xff]
    %v347 = vld [vmem:[#allocation7 + $0x128] sm:$0xf]
    %v348 = vld [vmem:[#allocation7 + $0x12c] sm:$0xff]
    %v349 = vld [vmem:[#allocation7 + $0x134] sm:$0xf]
    %v350 = vld [vmem:[#allocation7 + $0x138] sm:$0xff]
    %v351 = vld [vmem:[#allocation7 + $0x140] sm:$0xf]
    %v352 = vld [vmem:[#allocation7 + $0x144] sm:$0xff]
    %v353 = vld [vmem:[#allocation7 + $0x14c] sm:$0xf]
    %v354 = vld [vmem:[#allocation7 + $0x150] sm:$0xff]
    %v355 = vld [vmem:[#allocation7 + $0x158] sm:$0xf]
    %v356 = vld [vmem:[#allocation7 + $0x15c] sm:$0xff]
    %v357 = vld [vmem:[#allocation7 + $0x164] sm:$0xf]
    %v358 = vld [vmem:[#allocation7 + $0x168] sm:$0xff]
    %v359 = vld [vmem:[#allocation7 + $0x170] sm:$0xf]
    %v360 = vld [vmem:[#allocation7 + $0x174] sm:$0xff]
    %v361 = vld [vmem:[#allocation7 + $0x17c] sm:$0xf]
    %v362 = vld [vmem:[#allocation7 + $0x180] sm:$0xff]
    %v363 = vld [vmem:[#allocation7 + $0x188] sm:$0xf]
    %v364 = vld [vmem:[#allocation7 + $0x18c] sm:$0xff]
    %v365 = vld [vmem:[#allocation7 + $0x194] sm:$0xf]
    %v366 = vld [vmem:[#allocation7 + $0x198] sm:$0xff]
    %v367 = vld [vmem:[#allocation7 + $0x1a0] sm:$0xf]
    %v368 = vld [vmem:[#allocation7 + $0x1a4] sm:$0xff]
    %v369 = vld [vmem:[#allocation7 + $0x1ac] sm:$0xf]
    %v370 = vld [vmem:[#allocation7 + $0x1b0] sm:$0xff]
    %v371 = vld [vmem:[#allocation7 + $0x1b8] sm:$0xf]
    %v372 = vld [vmem:[#allocation7 + $0x1bc] sm:$0xff]
    %v373 = vld [vmem:[#allocation7 + $0x1c4] sm:$0xf]
    %v374 = vld [vmem:[#allocation7 + $0x1c8] sm:$0xff]
    %v375 = vld [vmem:[#allocation7 + $0x1d0] sm:$0xf]
    %v376 = vld [vmem:[#allocation7 + $0x1d4] sm:$0xff]
    %v377 = vld [vmem:[#allocation7 + $0x1dc] sm:$0xf]
    %v378 = vld [vmem:[#allocation7 + $0x1e0] sm:$0xff]
    %v379 = vld [vmem:[#allocation7 + $0x1e8] sm:$0xf]
    %v380 = vld [vmem:[#allocation7 + $0x1ec] sm:$0xff]
    %v381 = vld [vmem:[#allocation7 + $0x1f4] sm:$0xf]
    %v382 = vld [vmem:[#allocation7 + $0x1f8] sm:$0xff]
    %v383 = vld [vmem:[#allocation7 + $0x200] sm:$0xf]
    %v384 = vld [vmem:[#allocation7 + $0x204] sm:$0xff]
    %v385 = vld [vmem:[#allocation7 + $0x20c] sm:$0xf]
    %v386 = vld [vmem:[#allocation7 + $0x210] sm:$0xff]
    %v387 = vld [vmem:[#allocation7 + $0x218] sm:$0xf]
    %v388 = vld [vmem:[#allocation7 + $0x21c] sm:$0xff]
    %v389 = vld [vmem:[#allocation7 + $0x224] sm:$0xf]
    %v390 = vld [vmem:[#allocation7 + $0x228] sm:$0xff]
    %v391 = vld [vmem:[#allocation7 + $0x230] sm:$0xf]
    %v392 = vld [vmem:[#allocation7 + $0x234] sm:$0xff]
    %v393 = vld [vmem:[#allocation7 + $0x23c] sm:$0xf]
    %v394 = vld [vmem:[#allocation7 + $0x240] sm:$0xff]
    %v395 = vld [vmem:[#allocation7 + $0x248] sm:$0xf]
    %v396 = vld [vmem:[#allocation7 + $0x24c] sm:$0xff]
    %v397 = vld [vmem:[#allocation7 + $0x254] sm:$0xf]
    %v398 = vld [vmem:[#allocation7 + $0x258] sm:$0xff]
    %v399 = vld [vmem:[#allocation7 + $0x260] sm:$0xf]
    %v400 = vld [vmem:[#allocation7 + $0x264] sm:$0xff]
    %v401 = vld [vmem:[#allocation7 + $0x26c] sm:$0xf]
    %v402 = vld [vmem:[#allocation7 + $0x270] sm:$0xff]
    %v403 = vld [vmem:[#allocation7 + $0x278] sm:$0xf]
    %v404 = vld [vmem:[#allocation7 + $0x27c] sm:$0xff]
    %v405 = vld [vmem:[#allocation7 + $0x284] sm:$0xf]
    %v406 = vld [vmem:[#allocation7 + $0x288] sm:$0xff]
    %v407 = vld [vmem:[#allocation7 + $0x290] sm:$0xf]
    %v408 = vld [vmem:[#allocation7 + $0x294] sm:$0xff]
    %v409 = vld [vmem:[#allocation7 + $0x29c] sm:$0xf]
    %v410 = vld [vmem:[#allocation7 + $0x2a0] sm:$0xff]
    %v411 = vld [vmem:[#allocation7 + $0x2a8] sm:$0xf]
    %v412 = vld [vmem:[#allocation7 + $0x2ac] sm:$0xff]
    %v413 = vld [vmem:[#allocation7 + $0x2b4] sm:$0xf]
    %v414 = vld [vmem:[#allocation7 + $0x2b8] sm:$0xff]
    %v415 = vld [vmem:[#allocation7 + $0x2c0] sm:$0xf]
    %v416 = vld [vmem:[#allocation7 + $0x2c4] sm:$0xff]
    %v417 = vld [vmem:[#allocation7 + $0x2cc] sm:$0xf]
    %v418 = vld [vmem:[#allocation7 + $0x2d0] sm:$0xff]
    %v419 = vld [vmem:[#allocation7 + $0x2d8] sm:$0xf]
    %v420 = vld [vmem:[#allocation7 + $0x2dc] sm:$0xff]
    %v421 = vld [vmem:[#allocation7 + $0x2e4] sm:$0xf]
    %v422 = vld [vmem:[#allocation7 + $0x2e8] sm:$0xff]
    %v423 = vld [vmem:[#allocation7 + $0x2f0] sm:$0xf]
    %v424 = vld [vmem:[#allocation7 + $0x2f4] sm:$0xff]
    %v425 = vld [vmem:[#allocation7 + $0x2fc] sm:$0xf]
    %v426 = vld [vmem:[#allocation7 + $0x300] sm:$0xff]
    %v427 = vld [vmem:[#allocation7 + $0x308] sm:$0xf]
    %v428 = vld [vmem:[#allocation7 + $0x30c] sm:$0xff]
    %v429 = vld [vmem:[#allocation7 + $0x314] sm:$0xf]
    %v430 = vld [vmem:[#allocation7 + $0x318] sm:$0xff]
    %v431 = vld [vmem:[#allocation7 + $0x320] sm:$0xf]
    %v432 = vld [vmem:[#allocation7 + $0x324] sm:$0xff]
    %v433 = vld [vmem:[#allocation7 + $0x32c] sm:$0xf]
    %v434 = vld [vmem:[#allocation7 + $0x330] sm:$0xff]
    %v435 = vld [vmem:[#allocation7 + $0x338] sm:$0xf]
    %v436 = vld [vmem:[#allocation7 + $0x33c] sm:$0xff]
    %v437 = vld [vmem:[#allocation7 + $0x344] sm:$0xf]
    %v438 = vld [vmem:[#allocation7 + $0x348] sm:$0xff]
    %v439 = vld [vmem:[#allocation7 + $0x350] sm:$0xf]
    %v440 = vld [vmem:[#allocation7 + $0x354] sm:$0xff]
    %v441 = vld [vmem:[#allocation7 + $0x35c] sm:$0xf]
    %v442 = vld [vmem:[#allocation7 + $0x360] sm:$0xff]
    %v443 = vld [vmem:[#allocation7 + $0x368] sm:$0xf]
    %v444 = vld [vmem:[#allocation7 + $0x36c] sm:$0xff]
    %v445 = vld [vmem:[#allocation7 + $0x374] sm:$0xf]
    %v446 = vld [vmem:[#allocation7 + $0x378] sm:$0xff]
    %v447 = vld [vmem:[#allocation7 + $0x380] sm:$0xf]
    %v448 = vld [vmem:[#allocation7 + $0x384] sm:$0xff]
    %v449 = vld [vmem:[#allocation7 + $0x38c] sm:$0xf]
    %v450 = vld [vmem:[#allocation7 + $0x390] sm:$0xff]
    %v451 = vld [vmem:[#allocation7 + $0x398] sm:$0xf]
    %v452 = vld [vmem:[#allocation7 + $0x39c] sm:$0xff]
    %v453 = vld [vmem:[#allocation7 + $0x3a4] sm:$0xf]
    %v454 = vld [vmem:[#allocation7 + $0x3a8] sm:$0xff]
    %v455 = vld [vmem:[#allocation7 + $0x3b0] sm:$0xf]
    %v456 = vld [vmem:[#allocation7 + $0x3b4] sm:$0xff]
    %v457 = vld [vmem:[#allocation7 + $0x3bc] sm:$0xf]
    %v458 = vld [vmem:[#allocation7 + $0x3c0] sm:$0xff]
    %v459 = vld [vmem:[#allocation7 + $0x3c8] sm:$0xf]
    %v460 = vld [vmem:[#allocation7 + $0x3cc] sm:$0xff]
    %v461 = vld [vmem:[#allocation7 + $0x3d4] sm:$0xf]
    %v462 = vld [vmem:[#allocation7 + $0x3d8] sm:$0xff]
    %v463 = vld [vmem:[#allocation7 + $0x3e0] sm:$0xf]
    %v464 = vld [vmem:[#allocation7 + $0x3e4] sm:$0xff]
    %v465 = vld [vmem:[#allocation7 + $0x3ec] sm:$0xf]
    %v466 = vld [vmem:[#allocation7 + $0x3f0] sm:$0xff]
    %v467 = vld [vmem:[#allocation7 + $0x3f8] sm:$0xf]
    %v468 = vld [vmem:[#allocation7 + $0x3fc] sm:$0xff]
    %v469 = vld [vmem:[#allocation7 + $0x404] sm:$0xf]
    %v470 = vld [vmem:[#allocation7 + $0x408] sm:$0xff]
    %v471 = vld [vmem:[#allocation7 + $0x410] sm:$0xf]
    %v472 = vld [vmem:[#allocation7 + $0x414] sm:$0xff]
    %v473 = vld [vmem:[#allocation7 + $0x41c] sm:$0xf]
    %v474 = vld [vmem:[#allocation7 + $0x420] sm:$0xff]
    %v475 = vld [vmem:[#allocation7 + $0x428] sm:$0xf]
    %v476 = vld [vmem:[#allocation7 + $0x42c] sm:$0xff]
    %v477 = vld [vmem:[#allocation7 + $0x434] sm:$0xf]
    %v478 = vld [vmem:[#allocation7 + $0x438] sm:$0xff]
    %v479 = vld [vmem:[#allocation7 + $0x440] sm:$0xf]
    %v480 = vld [vmem:[#allocation7 + $0x444] sm:$0xff]
    %v481 = vld [vmem:[#allocation7 + $0x44c] sm:$0xf]
    %v482 = vld [vmem:[#allocation7 + $0x450] sm:$0xff]
    %v483 = vld [vmem:[#allocation7 + $0x458] sm:$0xf]
    %v484 = vld [vmem:[#allocation7 + $0x45c] sm:$0xff]
    %v485 = vld [vmem:[#allocation7 + $0x464] sm:$0xf]
    %v486 = vld [vmem:[#allocation7 + $0x468] sm:$0xff]
    %v487 = vld [vmem:[#allocation7 + $0x470] sm:$0xf]
    %v488 = vld [vmem:[#allocation7 + $0x474] sm:$0xff]
    %v489 = vld [vmem:[#allocation7 + $0x47c] sm:$0xf]
    %v490 = vld [vmem:[%s7] sm:$0xff]
    %v491 = vld [vmem:[%s7 + $0x8] sm:$0xf]
    %v492 = vld [vmem:[%s7 + $0xc] sm:$0xff]
    %v493 = vld [vmem:[%s7 + $0x14] sm:$0xf]
    %v494 = vld [vmem:[%s7 + $0x18] sm:$0xff]
    %v495 = vld [vmem:[%s7 + $0x20] sm:$0xf]
    %v496 = vld [vmem:[%s7 + $0x24] sm:$0xff]
    %v497 = vld [vmem:[%s7 + $0x2c] sm:$0xf]
    %v498 = vld [vmem:[%s7 + $0x30] sm:$0xff]
    %v499 = vld [vmem:[%s7 + $0x38] sm:$0xf]
    %v500 = vld [vmem:[%s7 + $0x3c] sm:$0xff]
    %v501 = vld [vmem:[%s7 + $0x44] sm:$0xf]
    %v502 = vld [vmem:[%s7 + $0x48] sm:$0xff]
    %v503 = vld [vmem:[%s7 + $0x50] sm:$0xf]
    %v504 = vld [vmem:[%s7 + $0x54] sm:$0xff]
    %v505 = vld [vmem:[%s7 + $0x5c] sm:$0xf]
    %v522 = vunpack.c.l.b16 %v490
    %v523 = vunpack.c.h.b16 %v490
    %v524 = vunpack.c.l.b16 %v491
    %v525 = vunpack.c.l.b16 %v492
    %v526 = vunpack.c.h.b16 %v492
    %v527 = vunpack.c.l.b16 %v493
    %v528 = vunpack.c.l.b16 %v494
    %v529 = vunpack.c.h.b16 %v494
    %v530 = vunpack.c.l.b16 %v495
    %v531 = vunpack.c.l.b16 %v496
    %v532 = vunpack.c.h.b16 %v496
    %v533 = vunpack.c.l.b16 %v497
    %v534 = vunpack.c.l.b16 %v498
    %v535 = vunpack.c.h.b16 %v498
    %v536 = vunpack.c.l.b16 %v499
    %v537 = vunpack.c.l.b16 %v500
    %v538 = vunpack.c.h.b16 %v500
    %v539 = vunpack.c.l.b16 %v501
    %v540 = vunpack.c.l.b16 %v502
    %v541 = vunpack.c.h.b16 %v502
    %v542 = vunpack.c.l.b16 %v503
    %v543 = vunpack.c.l.b16 %v504
    %v544 = vunpack.c.h.b16 %v504
    %v545 = vunpack.c.l.b16 %v505
    %v546 = vpack.c.b16 %v525, %v522
    %v547 = vpack.c.b16 %v526, %v523
    %v548 = vpack.c.b16 %v527, %v524
    %v549 = vpack.c.b16 %v531, %v528
    %v550 = vpack.c.b16 %v532, %v529
    %v551 = vpack.c.b16 %v533, %v530
    %v552 = vpack.c.b16 %v537, %v534
    %v553 = vpack.c.b16 %v538, %v535
    %v554 = vpack.c.b16 %v539, %v536
    %v555 = vpack.c.b16 %v543, %v540
    %v556 = vpack.c.b16 %v544, %v541
    %v557 = vpack.c.b16 %v545, %v542
    %vm570 = vcmask 523264
    %v572 = vsel %vm570, %v297, 0
    %574 = vmatprep.subr.bf16.mxu0 0
    %575 = vmatpush1.bf16.msra.mxu0 0
    %576 = vmatprep.subr.bf16.mxu0 0
    %577 = vmatpush1.bf16.msra.mxu0 0
    %578 = vmatprep.subr.bf16.mxu0 0
    %579 = vmatpush1.bf16.msra.mxu0 0
    %580 = vmatprep.subr.bf16.mxu0 0
    %581 = vmatpush1.bf16.msra.mxu0 0
    %582 = vmatprep.subr.bf16.mxu0 %v556
    %583 = vmatpush1.bf16.msra.mxu0 %v555
    %584 = vmatprep.subr.bf16.mxu0 %v553
    %585 = vmatpush1.bf16.msra.mxu0 %v552
    %586 = vmatprep.subr.bf16.mxu0 %v550
    %587 = vmatpush1.bf16.msra.mxu0 %v549
    %588 = vmatprep.subr.bf16.mxu0 %v547
    %589 = vmatpush1.bf16.msra.mxu0 %v546
    %590 = vmatprep.subr.bf16.mxu0 0
    %591 = vmatpush2.bf16.msra.mxu0 0
    %592 = vmatprep.subr.bf16.mxu0 0
    %593 = vmatpush2.bf16.msra.mxu0 0
    %594 = vmatprep.subr.bf16.mxu0 0
    %595 = vmatpush2.bf16.msra.mxu0 0
    %596 = vmatprep.subr.bf16.mxu0 0
    %597 = vmatpush2.bf16.msra.mxu0 0
    %598 = vmatprep.subr.bf16.mxu0 0
    %599 = vmatpush2.bf16.msra.mxu0 0
    %600 = vmatprep.subr.bf16.mxu0 0
    %601 = vmatpush2.bf16.msra.mxu0 0
    %602 = vmatprep.subr.bf16.mxu0 0
    %603 = vmatpush2.bf16.msra.mxu0 0
    %604 = vmatprep.subr.bf16.mxu0 0
    %605 = vmatpush2.bf16.msra.mxu0 0
    %606 = vmatprep.mubr.bf16.mxu0 0
    %607 = vmatmul.mubr.bf16.gmra.mxu0 %v572
    %v608 = vpop.f32.mrf.mxu0
    %v609 = vadd.f32 0.0, %v608
    %v610 = vpop.f32.mrf.mxu0
    %v611 = vadd.f32 0.0, %v610
    %v612 = vpop.f32.mrf.mxu0
    %v613 = vpop.f32.mrf.mxu0
    %614 = vdwg.mxu0
    %615 = vmatprep.subr.bf16.mxu0 0
    %616 = vmatpush1.bf16.msra.mxu0 0
    %617 = vmatprep.subr.bf16.mxu0 0
    %618 = vmatpush1.bf16.msra.mxu0 0
    %619 = vmatprep.subr.bf16.mxu0 0
    %620 = vmatpush1.bf16.msra.mxu0 0
    %621 = vmatprep.subr.bf16.mxu0 0
    %622 = vmatpush1.bf16.msra.mxu0 0
    %623 = vmatprep.subr.bf16.mxu0 0
    %624 = vmatpush1.bf16.msra.mxu0 %v557
    %625 = vmatprep.subr.bf16.mxu0 0
    %626 = vmatpush1.bf16.msra.mxu0 %v554
    %627 = vmatprep.subr.bf16.mxu0 0
    %628 = vmatpush1.bf16.msra.mxu0 %v551
    %629 = vmatprep.subr.bf16.mxu0 0
    %630 = vmatpush1.bf16.msra.mxu0 %v548
    %631 = vmatprep.subr.bf16.mxu0 0
    %632 = vmatpush2.bf16.msra.mxu0 0
    %633 = vmatprep.subr.bf16.mxu0 0
    %634 = vmatpush2.bf16.msra.mxu0 0
    %635 = vmatprep.subr.bf16.mxu0 0
    %636 = vmatpush2.bf16.msra.mxu0 0
    %637 = vmatprep.subr.bf16.mxu0 0
    %638 = vmatpush2.bf16.msra.mxu0 0
    %639 = vmatprep.subr.bf16.mxu0 0
    %640 = vmatpush2.bf16.msra.mxu0 0
    %641 = vmatprep.subr.bf16.mxu0 0
    %642 = vmatpush2.bf16.msra.mxu0 0
    %643 = vmatprep.subr.bf16.mxu0 0
    %644 = vmatpush2.bf16.msra.mxu0 0
    %645 = vmatprep.subr.bf16.mxu0 0
    %646 = vmatpush2.bf16.msra.mxu0 0
    %647 = vmatprep.mubr.bf16.mxu0 0
    %648 = vmatmul.mubr.bf16.gmra.mxu0 %v572
    %v649 = vpop.f32.mrf.mxu0
    %v650 = vadd.f32 0.0, %v649
    %v651 = vpop.f32.mrf.mxu0
    %v652 = vpop.f32.mrf.mxu0
    %v653 = vpop.f32.mrf.mxu0
    %654 = vdwg.mxu0
    %v658 = vunpack.c.l.b16 %v112
    %v659 = vunpack.c.h.b16 %v112
    %v660 = vunpack.c.l.b16 %v113
    %v661 = vunpack.c.h.b16 %v113
    %v662 = vunpack.c.l.b16 %v114
    %v663 = vunpack.c.h.b16 %v114
    %v664 = vpack.c.b16 %v658, %v658
    %v665 = vpack.c.b16 %v659, %v659
    %v666 = vpack.c.b16 %v660, %v660
    %v667 = vpack.c.b16 %v661, %v661
    %v668 = vpack.c.b16 %v662, %v662
    %v669 = vpack.c.b16 %v663, %v663
    %v868 = vunpack.c.l.b16 %v298
    %v869 = vunpack.c.h.b16 %v298
    %v870 = vunpack.c.l.b16 %v299
    %v871 = vunpack.c.l.b16 %v300
    %v872 = vunpack.c.h.b16 %v300
    %v873 = vunpack.c.l.b16 %v301
    %v874 = vunpack.c.l.b16 %v302
    %v875 = vunpack.c.h.b16 %v302
    %v876 = vunpack.c.l.b16 %v303
    %v877 = vunpack.c.l.b16 %v304
    %v878 = vunpack.c.h.b16 %v304
    %v879 = vunpack.c.l.b16 %v305
    %v880 = vunpack.c.l.b16 %v306
    %v881 = vunpack.c.h.b16 %v306
    %v882 = vunpack.c.l.b16 %v307
    %v883 = vunpack.c.l.b16 %v308
    %v884 = vunpack.c.h.b16 %v308
    %v885 = vunpack.c.l.b16 %v309
    %v886 = vunpack.c.l.b16 %v310
    %v887 = vunpack.c.h.b16 %v310
    %v888 = vunpack.c.l.b16 %v311
    %v889 = vunpack.c.l.b16 %v312
    %v890 = vunpack.c.h.b16 %v312
    %v891 = vunpack.c.l.b16 %v313
    %v892 = vunpack.c.l.b16 %v314
    %v893 = vunpack.c.h.b16 %v314
    %v894 = vunpack.c.l.b16 %v315
    %v895 = vunpack.c.l.b16 %v316
    %v896 = vunpack.c.h.b16 %v316
    %v897 = vunpack.c.l.b16 %v317
    %v898 = vunpack.c.l.b16 %v318
    %v899 = vunpack.c.h.b16 %v318
    %v900 = vunpack.c.l.b16 %v319
    %v901 = vunpack.c.l.b16 %v320
    %v902 = vunpack.c.h.b16 %v320
    %v903 = vunpack.c.l.b16 %v321
    %v904 = vunpack.c.l.b16 %v322
    %v905 = vunpack.c.h.b16 %v322
    %v906 = vunpack.c.l.b16 %v323
    %v907 = vunpack.c.l.b16 %v324
    %v908 = vunpack.c.h.b16 %v324
    %v909 = vunpack.c.l.b16 %v325
    %v910 = vunpack.c.l.b16 %v326
    %v911 = vunpack.c.h.b16 %v326
    %v912 = vunpack.c.l.b16 %v327
    %v913 = vunpack.c.l.b16 %v328
    %v914 = vunpack.c.h.b16 %v328
    %v915 = vunpack.c.l.b16 %v329
    %v916 = vunpack.c.l.b16 %v330
    %v917 = vunpack.c.h.b16 %v330
    %v918 = vunpack.c.l.b16 %v331
    %v919 = vunpack.c.l.b16 %v332
    %v920 = vunpack.c.h.b16 %v332
    %v921 = vunpack.c.l.b16 %v333
    %v922 = vunpack.c.l.b16 %v334
    %v923 = vunpack.c.h.b16 %v334
    %v924 = vunpack.c.l.b16 %v335
    %v925 = vunpack.c.l.b16 %v336
    %v926 = vunpack.c.h.b16 %v336
    %v927 = vunpack.c.l.b16 %v337
    %v928 = vunpack.c.l.b16 %v338
    %v929 = vunpack.c.h.b16 %v338
    %v930 = vunpack.c.l.b16 %v339
    %v931 = vunpack.c.l.b16 %v340
    %v932 = vunpack.c.h.b16 %v340
    %v933 = vunpack.c.l.b16 %v341
    %v934 = vunpack.c.l.b16 %v342
    %v935 = vunpack.c.h.b16 %v342
    %v936 = vunpack.c.l.b16 %v343
    %v937 = vunpack.c.l.b16 %v344
    %v938 = vunpack.c.h.b16 %v344
    %v939 = vunpack.c.l.b16 %v345
    %v940 = vunpack.c.l.b16 %v346
    %v941 = vunpack.c.h.b16 %v346
    %v942 = vunpack.c.l.b16 %v347
    %v943 = vunpack.c.l.b16 %v348
    %v944 = vunpack.c.h.b16 %v348
    %v945 = vunpack.c.l.b16 %v349
    %v946 = vunpack.c.l.b16 %v350
    %v947 = vunpack.c.h.b16 %v350
    %v948 = vunpack.c.l.b16 %v351
    %v949 = vunpack.c.l.b16 %v352
    %v950 = vunpack.c.h.b16 %v352
    %v951 = vunpack.c.l.b16 %v353
    %v952 = vunpack.c.l.b16 %v354
    %v953 = vunpack.c.h.b16 %v354
    %v954 = vunpack.c.l.b16 %v355
    %v955 = vunpack.c.l.b16 %v356
    %v956 = vunpack.c.h.b16 %v356
    %v957 = vunpack.c.l.b16 %v357
    %v958 = vunpack.c.l.b16 %v358
    %v959 = vunpack.c.h.b16 %v358
    %v960 = vunpack.c.l.b16 %v359
    %v961 = vunpack.c.l.b16 %v360
    %v962 = vunpack.c.h.b16 %v360
    %v963 = vunpack.c.l.b16 %v361
    %v964 = vunpack.c.l.b16 %v362
    %v965 = vunpack.c.h.b16 %v362
    %v966 = vunpack.c.l.b16 %v363
    %v967 = vunpack.c.l.b16 %v364
    %v968 = vunpack.c.h.b16 %v364
    %v969 = vunpack.c.l.b16 %v365
    %v970 = vunpack.c.l.b16 %v366
    %v971 = vunpack.c.h.b16 %v366
    %v972 = vunpack.c.l.b16 %v367
    %v973 = vunpack.c.l.b16 %v368
    %v974 = vunpack.c.h.b16 %v368
    %v975 = vunpack.c.l.b16 %v369
    %v976 = vunpack.c.l.b16 %v370
    %v977 = vunpack.c.h.b16 %v370
    %v978 = vunpack.c.l.b16 %v371
    %v979 = vunpack.c.l.b16 %v372
    %v980 = vunpack.c.h.b16 %v372
    %v981 = vunpack.c.l.b16 %v373
    %v982 = vunpack.c.l.b16 %v374
    %v983 = vunpack.c.h.b16 %v374
    %v984 = vunpack.c.l.b16 %v375
    %v985 = vunpack.c.l.b16 %v376
    %v986 = vunpack.c.h.b16 %v376
    %v987 = vunpack.c.l.b16 %v377
    %v988 = vunpack.c.l.b16 %v378
    %v989 = vunpack.c.h.b16 %v378
    %v990 = vunpack.c.l.b16 %v379
    %v991 = vunpack.c.l.b16 %v380
    %v992 = vunpack.c.h.b16 %v380
    %v993 = vunpack.c.l.b16 %v381
    %v994 = vunpack.c.l.b16 %v382
    %v995 = vunpack.c.h.b16 %v382
    %v996 = vunpack.c.l.b16 %v383
    %v997 = vunpack.c.l.b16 %v384
    %v998 = vunpack.c.h.b16 %v384
    %v999 = vunpack.c.l.b16 %v385
    %v1000 = vunpack.c.l.b16 %v386
    %v1001 = vunpack.c.h.b16 %v386
    %v1002 = vunpack.c.l.b16 %v387
    %v1003 = vunpack.c.l.b16 %v388
    %v1004 = vunpack.c.h.b16 %v388
    %v1005 = vunpack.c.l.b16 %v389
    %v1006 = vunpack.c.l.b16 %v390
    %v1007 = vunpack.c.h.b16 %v390
    %v1008 = vunpack.c.l.b16 %v391
    %v1009 = vunpack.c.l.b16 %v392
    %v1010 = vunpack.c.h.b16 %v392
    %v1011 = vunpack.c.l.b16 %v393
    %v1012 = vunpack.c.l.b16 %v394
    %v1013 = vunpack.c.h.b16 %v394
    %v1014 = vunpack.c.l.b16 %v395
    %v1015 = vunpack.c.l.b16 %v396
    %v1016 = vunpack.c.h.b16 %v396
    %v1017 = vunpack.c.l.b16 %v397
    %v1018 = vunpack.c.l.b16 %v398
    %v1019 = vunpack.c.h.b16 %v398
    %v1020 = vunpack.c.l.b16 %v399
    %v1021 = vunpack.c.l.b16 %v400
    %v1022 = vunpack.c.h.b16 %v400
    %v1023 = vunpack.c.l.b16 %v401
    %v1024 = vunpack.c.l.b16 %v402
    %v1025 = vunpack.c.h.b16 %v402
    %v1026 = vunpack.c.l.b16 %v403
    %v1027 = vunpack.c.l.b16 %v404
    %v1028 = vunpack.c.h.b16 %v404
    %v1029 = vunpack.c.l.b16 %v405
    %v1030 = vunpack.c.l.b16 %v406
    %v1031 = vunpack.c.h.b16 %v406
    %v1032 = vunpack.c.l.b16 %v407
    %v1033 = vunpack.c.l.b16 %v408
    %v1034 = vunpack.c.h.b16 %v408
    %v1035 = vunpack.c.l.b16 %v409
    %v1036 = vunpack.c.l.b16 %v410
    %v1037 = vunpack.c.h.b16 %v410
    %v1038 = vunpack.c.l.b16 %v411
    %v1039 = vunpack.c.l.b16 %v412
    %v1040 = vunpack.c.h.b16 %v412
    %v1041 = vunpack.c.l.b16 %v413
    %v1042 = vunpack.c.l.b16 %v414
    %v1043 = vunpack.c.h.b16 %v414
    %v1044 = vunpack.c.l.b16 %v415
    %v1045 = vunpack.c.l.b16 %v416
    %v1046 = vunpack.c.h.b16 %v416
    %v1047 = vunpack.c.l.b16 %v417
    %v1048 = vunpack.c.l.b16 %v418
    %v1049 = vunpack.c.h.b16 %v418
    %v1050 = vunpack.c.l.b16 %v419
    %v1051 = vunpack.c.l.b16 %v420
    %v1052 = vunpack.c.h.b16 %v420
    %v1053 = vunpack.c.l.b16 %v421
    %v1054 = vunpack.c.l.b16 %v422
    %v1055 = vunpack.c.h.b16 %v422
    %v1056 = vunpack.c.l.b16 %v423
    %v1057 = vunpack.c.l.b16 %v424
    %v1058 = vunpack.c.h.b16 %v424
    %v1059 = vunpack.c.l.b16 %v425
    %v1060 = vunpack.c.l.b16 %v426
    %v1061 = vunpack.c.h.b16 %v426
    %v1062 = vunpack.c.l.b16 %v427
    %v1063 = vunpack.c.l.b16 %v428
    %v1064 = vunpack.c.h.b16 %v428
    %v1065 = vunpack.c.l.b16 %v429
    %v1066 = vunpack.c.l.b16 %v430
    %v1067 = vunpack.c.h.b16 %v430
    %v1068 = vunpack.c.l.b16 %v431
    %v1069 = vunpack.c.l.b16 %v432
    %v1070 = vunpack.c.h.b16 %v432
    %v1071 = vunpack.c.l.b16 %v433
    %v1072 = vunpack.c.l.b16 %v434
    %v1073 = vunpack.c.h.b16 %v434
    %v1074 = vunpack.c.l.b16 %v435
    %v1075 = vunpack.c.l.b16 %v436
    %v1076 = vunpack.c.h.b16 %v436
    %v1077 = vunpack.c.l.b16 %v437
    %v1078 = vunpack.c.l.b16 %v438
    %v1079 = vunpack.c.h.b16 %v438
    %v1080 = vunpack.c.l.b16 %v439
    %v1081 = vunpack.c.l.b16 %v440
    %v1082 = vunpack.c.h.b16 %v440
    %v1083 = vunpack.c.l.b16 %v441
    %v1084 = vunpack.c.l.b16 %v442
    %v1085 = vunpack.c.h.b16 %v442
    %v1086 = vunpack.c.l.b16 %v443
    %v1087 = vunpack.c.l.b16 %v444
    %v1088 = vunpack.c.h.b16 %v444
    %v1089 = vunpack.c.l.b16 %v445
    %v1090 = vunpack.c.l.b16 %v446
    %v1091 = vunpack.c.h.b16 %v446
    %v1092 = vunpack.c.l.b16 %v447
    %v1093 = vunpack.c.l.b16 %v448
    %v1094 = vunpack.c.h.b16 %v448
    %v1095 = vunpack.c.l.b16 %v449
    %v1096 = vunpack.c.l.b16 %v450
    %v1097 = vunpack.c.h.b16 %v450
    %v1098 = vunpack.c.l.b16 %v451
    %v1099 = vunpack.c.l.b16 %v452
    %v1100 = vunpack.c.h.b16 %v452
    %v1101 = vunpack.c.l.b16 %v453
    %v1102 = vunpack.c.l.b16 %v454
    %v1103 = vunpack.c.h.b16 %v454
    %v1104 = vunpack.c.l.b16 %v455
    %v1105 = vunpack.c.l.b16 %v456
    %v1106 = vunpack.c.h.b16 %v456
    %v1107 = vunpack.c.l.b16 %v457
    %v1108 = vunpack.c.l.b16 %v458
    %v1109 = vunpack.c.h.b16 %v458
    %v1110 = vunpack.c.l.b16 %v459
    %v1111 = vunpack.c.l.b16 %v460
    %v1112 = vunpack.c.h.b16 %v460
    %v1113 = vunpack.c.l.b16 %v461
    %v1114 = vunpack.c.l.b16 %v462
    %v1115 = vunpack.c.h.b16 %v462
    %v1116 = vunpack.c.l.b16 %v463
    %v1117 = vunpack.c.l.b16 %v464
    %v1118 = vunpack.c.h.b16 %v464
    %v1119 = vunpack.c.l.b16 %v465
    %v1120 = vunpack.c.l.b16 %v466
    %v1121 = vunpack.c.h.b16 %v466
    %v1122 = vunpack.c.l.b16 %v467
    %v1123 = vunpack.c.l.b16 %v468
    %v1124 = vunpack.c.h.b16 %v468
    %v1125 = vunpack.c.l.b16 %v469
    %v1126 = vunpack.c.l.b16 %v470
    %v1127 = vunpack.c.h.b16 %v470
    %v1128 = vunpack.c.l.b16 %v471
    %v1129 = vunpack.c.l.b16 %v472
    %v1130 = vunpack.c.h.b16 %v472
    %v1131 = vunpack.c.l.b16 %v473
    %v1132 = vunpack.c.l.b16 %v474
    %v1133 = vunpack.c.h.b16 %v474
    %v1134 = vunpack.c.l.b16 %v475
    %v1135 = vunpack.c.l.b16 %v476
    %v1136 = vunpack.c.h.b16 %v476
    %v1137 = vunpack.c.l.b16 %v477
    %v1138 = vunpack.c.l.b16 %v478
    %v1139 = vunpack.c.h.b16 %v478
    %v1140 = vunpack.c.l.b16 %v479
    %v1141 = vunpack.c.l.b16 %v480
    %v1142 = vunpack.c.h.b16 %v480
    %v1143 = vunpack.c.l.b16 %v481
    %v1144 = vunpack.c.l.b16 %v482
    %v1145 = vunpack.c.h.b16 %v482
    %v1146 = vunpack.c.l.b16 %v483
    %v1147 = vunpack.c.l.b16 %v484
    %v1148 = vunpack.c.h.b16 %v484
    %v1149 = vunpack.c.l.b16 %v485
    %v1150 = vunpack.c.l.b16 %v486
    %v1151 = vunpack.c.h.b16 %v486
    %v1152 = vunpack.c.l.b16 %v487
    %v1153 = vunpack.c.l.b16 %v488
    %v1154 = vunpack.c.h.b16 %v488
    %v1155 = vunpack.c.l.b16 %v489
    %v1156 = vpack.c.b16 %v871, %v868
    %v1157 = vpack.c.b16 %v872, %v869
    %v1158 = vpack.c.b16 %v873, %v870
    %v1159 = vpack.c.b16 %v877, %v874
    %v1160 = vpack.c.b16 %v878, %v875
    %v1161 = vpack.c.b16 %v879, %v876
    %v1162 = vpack.c.b16 %v883, %v880
    %v1163 = vpack.c.b16 %v884, %v881
    %v1164 = vpack.c.b16 %v885, %v882
    %v1165 = vpack.c.b16 %v889, %v886
    %v1166 = vpack.c.b16 %v890, %v887
    %v1167 = vpack.c.b16 %v891, %v888
    %v1168 = vpack.c.b16 %v895, %v892
    %v1169 = vpack.c.b16 %v896, %v893
    %v1170 = vpack.c.b16 %v897, %v894
    %v1171 = vpack.c.b16 %v901, %v898
    %v1172 = vpack.c.b16 %v902, %v899
    %v1173 = vpack.c.b16 %v903, %v900
    %v1174 = vpack.c.b16 %v907, %v904
    %v1175 = vpack.c.b16 %v908, %v905
    %v1176 = vpack.c.b16 %v909, %v906
    %v1177 = vpack.c.b16 %v913, %v910
    %v1178 = vpack.c.b16 %v914, %v911
    %v1179 = vpack.c.b16 %v915, %v912
    %v1180 = vpack.c.b16 %v919, %v916
    %v1181 = vpack.c.b16 %v920, %v917
    %v1182 = vpack.c.b16 %v921, %v918
    %v1183 = vpack.c.b16 %v925, %v922
    %v1184 = vpack.c.b16 %v926, %v923
    %v1185 = vpack.c.b16 %v927, %v924
    %v1186 = vpack.c.b16 %v931, %v928
    %v1187 = vpack.c.b16 %v932, %v929
    %v1188 = vpack.c.b16 %v933, %v930
    %v1189 = vpack.c.b16 %v937, %v934
    %v1190 = vpack.c.b16 %v938, %v935
    %v1191 = vpack.c.b16 %v939, %v936
    %v1192 = vpack.c.b16 %v943, %v940
    %v1193 = vpack.c.b16 %v944, %v941
    %v1194 = vpack.c.b16 %v945, %v942
    %v1195 = vpack.c.b16 %v949, %v946
    %v1196 = vpack.c.b16 %v950, %v947
    %v1197 = vpack.c.b16 %v951, %v948
    %v1198 = vpack.c.b16 %v955, %v952
    %v1199 = vpack.c.b16 %v956, %v953
    %v1200 = vpack.c.b16 %v957, %v954
    %v1201 = vpack.c.b16 %v961, %v958
    %v1202 = vpack.c.b16 %v962, %v959
    %v1203 = vpack.c.b16 %v963, %v960
    %v1204 = vpack.c.b16 %v967, %v964
    %v1205 = vpack.c.b16 %v968, %v965
    %v1206 = vpack.c.b16 %v969, %v966
    %v1207 = vpack.c.b16 %v973, %v970
    %v1208 = vpack.c.b16 %v974, %v971
    %v1209 = vpack.c.b16 %v975, %v972
    %v1210 = vpack.c.b16 %v979, %v976
    %v1211 = vpack.c.b16 %v980, %v977
    %v1212 = vpack.c.b16 %v981, %v978
    %v1213 = vpack.c.b16 %v985, %v982
    %v1214 = vpack.c.b16 %v986, %v983
    %v1215 = vpack.c.b16 %v987, %v984
    %v1216 = vpack.c.b16 %v991, %v988
    %v1217 = vpack.c.b16 %v992, %v989
    %v1218 = vpack.c.b16 %v993, %v990
    %v1219 = vpack.c.b16 %v997, %v994
    %v1220 = vpack.c.b16 %v998, %v995
    %v1221 = vpack.c.b16 %v999, %v996
    %v1222 = vpack.c.b16 %v1003, %v1000
    %v1223 = vpack.c.b16 %v1004, %v1001
    %v1224 = vpack.c.b16 %v1005, %v1002
    %v1225 = vpack.c.b16 %v1009, %v1006
    %v1226 = vpack.c.b16 %v1010, %v1007
    %v1227 = vpack.c.b16 %v1011, %v1008
    %v1228 = vpack.c.b16 %v1015, %v1012
    %v1229 = vpack.c.b16 %v1016, %v1013
    %v1230 = vpack.c.b16 %v1017, %v1014
    %v1231 = vpack.c.b16 %v1021, %v1018
    %v1232 = vpack.c.b16 %v1022, %v1019
    %v1233 = vpack.c.b16 %v1023, %v1020
    %v1234 = vpack.c.b16 %v1027, %v1024
    %v1235 = vpack.c.b16 %v1028, %v1025
    %v1236 = vpack.c.b16 %v1029, %v1026
    %v1237 = vpack.c.b16 %v1033, %v1030
    %v1238 = vpack.c.b16 %v1034, %v1031
    %v1239 = vpack.c.b16 %v1035, %v1032
    %v1240 = vpack.c.b16 %v1039, %v1036
    %v1241 = vpack.c.b16 %v1040, %v1037
    %v1242 = vpack.c.b16 %v1041, %v1038
    %v1243 = vpack.c.b16 %v1045, %v1042
    %v1244 = vpack.c.b16 %v1046, %v1043
    %v1245 = vpack.c.b16 %v1047, %v1044
    %v1246 = vpack.c.b16 %v1051, %v1048
    %v1247 = vpack.c.b16 %v1052, %v1049
    %v1248 = vpack.c.b16 %v1053, %v1050
    %v1249 = vpack.c.b16 %v1057, %v1054
    %v1250 = vpack.c.b16 %v1058, %v1055
    %v1251 = vpack.c.b16 %v1059, %v1056
    %v1252 = vpack.c.b16 %v1063, %v1060
    %v1253 = vpack.c.b16 %v1064, %v1061
    %v1254 = vpack.c.b16 %v1065, %v1062
    %v1255 = vpack.c.b16 %v1069, %v1066
    %v1256 = vpack.c.b16 %v1070, %v1067
    %v1257 = vpack.c.b16 %v1071, %v1068
    %v1258 = vpack.c.b16 %v1075, %v1072
    %v1259 = vpack.c.b16 %v1076, %v1073
    %v1260 = vpack.c.b16 %v1077, %v1074
    %v1261 = vpack.c.b16 %v1081, %v1078
    %v1262 = vpack.c.b16 %v1082, %v1079
    %v1263 = vpack.c.b16 %v1083, %v1080
    %v1264 = vpack.c.b16 %v1087, %v1084
    %v1265 = vpack.c.b16 %v1088, %v1085
    %v1266 = vpack.c.b16 %v1089, %v1086
    %v1267 = vpack.c.b16 %v1093, %v1090
    %v1268 = vpack.c.b16 %v1094, %v1091
    %v1269 = vpack.c.b16 %v1095, %v1092
    %v1270 = vpack.c.b16 %v1099, %v1096
    %v1271 = vpack.c.b16 %v1100, %v1097
    %v1272 = vpack.c.b16 %v1101, %v1098
    %v1273 = vpack.c.b16 %v1105, %v1102
    %v1274 = vpack.c.b16 %v1106, %v1103
    %v1275 = vpack.c.b16 %v1107, %v1104
    %v1276 = vpack.c.b16 %v1111, %v1108
    %v1277 = vpack.c.b16 %v1112, %v1109
    %v1278 = vpack.c.b16 %v1113, %v1110
    %v1279 = vpack.c.b16 %v1117, %v1114
    %v1280 = vpack.c.b16 %v1118, %v1115
    %v1281 = vpack.c.b16 %v1119, %v1116
    %v1282 = vpack.c.b16 %v1123, %v1120
    %v1283 = vpack.c.b16 %v1124, %v1121
    %v1284 = vpack.c.b16 %v1125, %v1122
    %v1285 = vpack.c.b16 %v1129, %v1126
    %v1286 = vpack.c.b16 %v1130, %v1127
    %v1287 = vpack.c.b16 %v1131, %v1128
    %v1288 = vpack.c.b16 %v1135, %v1132
    %v1289 = vpack.c.b16 %v1136, %v1133
    %v1290 = vpack.c.b16 %v1137, %v1134
    %v1291 = vpack.c.b16 %v1141, %v1138
    %v1292 = vpack.c.b16 %v1142, %v1139
    %v1293 = vpack.c.b16 %v1143, %v1140
    %v1294 = vpack.c.b16 %v1147, %v1144
    %v1295 = vpack.c.b16 %v1148, %v1145
    %v1296 = vpack.c.b16 %v1149, %v1146
    %v1297 = vpack.c.b16 %v1153, %v1150
    %v1298 = vpack.c.b16 %v1154, %v1151
    %v1299 = vpack.c.b16 %v1155, %v1152
    %1444 = vmatprep.subr.bf16.mxu0 %v1178
    %1445 = vmatpush1.bf16.msra.mxu0 %v1177
    %1446 = vmatprep.subr.bf16.mxu0 %v1175
    %1447 = vmatpush1.bf16.msra.mxu0 %v1174
    %1448 = vmatprep.subr.bf16.mxu0 %v1172
    %1449 = vmatpush1.bf16.msra.mxu0 %v1171
    %1450 = vmatprep.subr.bf16.mxu0 %v1169
    %1451 = vmatpush1.bf16.msra.mxu0 %v1168
    %1452 = vmatprep.subr.bf16.mxu0 %v1166
    %1453 = vmatpush1.bf16.msra.mxu0 %v1165
    %1454 = vmatprep.subr.bf16.mxu0 %v1163
    %1455 = vmatpush1.bf16.msra.mxu0 %v1162
    %1456 = vmatprep.subr.bf16.mxu0 %v1160
    %1457 = vmatpush1.bf16.msra.mxu0 %v1159
    %1458 = vmatprep.subr.bf16.mxu0 %v1157
    %1459 = vmatpush1.bf16.msra.mxu0 %v1156
    %1460 = vmatprep.subr.bf16.mxu0 %v1202
    %1461 = vmatpush2.bf16.msra.mxu0 %v1201
    %1462 = vmatprep.subr.bf16.mxu0 %v1199
    %1463 = vmatpush2.bf16.msra.mxu0 %v1198
    %1464 = vmatprep.subr.bf16.mxu0 %v1196
    %1465 = vmatpush2.bf16.msra.mxu0 %v1195
    %1466 = vmatprep.subr.bf16.mxu0 %v1193
    %1467 = vmatpush2.bf16.msra.mxu0 %v1192
    %1468 = vmatprep.subr.bf16.mxu0 %v1190
    %1469 = vmatpush2.bf16.msra.mxu0 %v1189
    %1470 = vmatprep.subr.bf16.mxu0 %v1187
    %1471 = vmatpush2.bf16.msra.mxu0 %v1186
    %1472 = vmatprep.subr.bf16.mxu0 %v1184
    %1473 = vmatpush2.bf16.msra.mxu0 %v1183
    %1474 = vmatprep.subr.bf16.mxu0 %v1181
    %1475 = vmatpush2.bf16.msra.mxu0 %v1180
    %1476 = vmatprep.mubr.bf16.mxu0 %v665
    %1477 = vmatmul.mubr.bf16.gmra.mxu0 %v664
    %v1478 = vpop.f32.mrf.mxu0
    %v1479 = vadd.f32 %v609, %v1478
    %v1480 = vpop.f32.mrf.mxu0
    %v1481 = vadd.f32 %v611, %v1480
    %v1482 = vpop.f32.mrf.mxu0
    %v1483 = vpop.f32.mrf.mxu0
    %1484 = vdwg.mxu0
    %1485 = vmatprep.subr.bf16.mxu0 %v1226
    %1486 = vmatpush1.bf16.msra.mxu0 %v1225
    %1487 = vmatprep.subr.bf16.mxu0 %v1223
    %1488 = vmatpush1.bf16.msra.mxu0 %v1222
    %1489 = vmatprep.subr.bf16.mxu0 %v1220
    %1490 = vmatpush1.bf16.msra.mxu0 %v1219
    %1491 = vmatprep.subr.bf16.mxu0 %v1217
    %1492 = vmatpush1.bf16.msra.mxu0 %v1216
    %1493 = vmatprep.subr.bf16.mxu0 %v1214
    %1494 = vmatpush1.bf16.msra.mxu0 %v1213
    %1495 = vmatprep.subr.bf16.mxu0 %v1211
    %1496 = vmatpush1.bf16.msra.mxu0 %v1210
    %1497 = vmatprep.subr.bf16.mxu0 %v1208
    %1498 = vmatpush1.bf16.msra.mxu0 %v1207
    %1499 = vmatprep.subr.bf16.mxu0 %v1205
    %1500 = vmatpush1.bf16.msra.mxu0 %v1204
    %1501 = vmatprep.subr.bf16.mxu0 %v1250
    %1502 = vmatpush2.bf16.msra.mxu0 %v1249
    %1503 = vmatprep.subr.bf16.mxu0 %v1247
    %1504 = vmatpush2.bf16.msra.mxu0 %v1246
    %1505 = vmatprep.subr.bf16.mxu0 %v1244
    %1506 = vmatpush2.bf16.msra.mxu0 %v1243
    %1507 = vmatprep.subr.bf16.mxu0 %v1241
    %1508 = vmatpush2.bf16.msra.mxu0 %v1240
    %1509 = vmatprep.subr.bf16.mxu0 %v1238
    %1510 = vmatpush2.bf16.msra.mxu0 %v1237
    %1511 = vmatprep.subr.bf16.mxu0 %v1235
    %1512 = vmatpush2.bf16.msra.mxu0 %v1234
    %1513 = vmatprep.subr.bf16.mxu0 %v1232
    %1514 = vmatpush2.bf16.msra.mxu0 %v1231
    %1515 = vmatprep.subr.bf16.mxu0 %v1229
    %1516 = vmatpush2.bf16.msra.mxu0 %v1228
    %1517 = vmatprep.mubr.bf16.mxu0 %v667
    %1518 = vmatmul.mubr.bf16.gmra.mxu0 %v666
    %v1519 = vpop.f32.mrf.mxu0
    %v1520 = vadd.f32 %v1479, %v1519
    %v1521 = vpop.f32.mrf.mxu0
    %v1522 = vadd.f32 %v1481, %v1521
    %v1523 = vpop.f32.mrf.mxu0
    %v1524 = vpop.f32.mrf.mxu0
    %1525 = vdwg.mxu0
    %1526 = vmatprep.subr.bf16.mxu0 %v1274
    %1527 = vmatpush1.bf16.msra.mxu0 %v1273
    %1528 = vmatprep.subr.bf16.mxu0 %v1271
    %1529 = vmatpush1.bf16.msra.mxu0 %v1270
    %1530 = vmatprep.subr.bf16.mxu0 %v1268
    %1531 = vmatpush1.bf16.msra.mxu0 %v1267
    %1532 = vmatprep.subr.bf16.mxu0 %v1265
    %1533 = vmatpush1.bf16.msra.mxu0 %v1264
    %1534 = vmatprep.subr.bf16.mxu0 %v1262
    %1535 = vmatpush1.bf16.msra.mxu0 %v1261
    %1536 = vmatprep.subr.bf16.mxu0 %v1259
    %1537 = vmatpush1.bf16.msra.mxu0 %v1258
    %1538 = vmatprep.subr.bf16.mxu0 %v1256
    %1539 = vmatpush1.bf16.msra.mxu0 %v1255
    %1540 = vmatprep.subr.bf16.mxu0 %v1253
    %1541 = vmatpush1.bf16.msra.mxu0 %v1252
    %1542 = vmatprep.subr.bf16.mxu0 %v1298
    %1543 = vmatpush2.bf16.msra.mxu0 %v1297
    %1544 = vmatprep.subr.bf16.mxu0 %v1295
    %1545 = vmatpush2.bf16.msra.mxu0 %v1294
    %1546 = vmatprep.subr.bf16.mxu0 %v1292
    %1547 = vmatpush2.bf16.msra.mxu0 %v1291
    %1548 = vmatprep.subr.bf16.mxu0 %v1289
    %1549 = vmatpush2.bf16.msra.mxu0 %v1288
    %1550 = vmatprep.subr.bf16.mxu0 %v1286
    %1551 = vmatpush2.bf16.msra.mxu0 %v1285
    %1552 = vmatprep.subr.bf16.mxu0 %v1283
    %1553 = vmatpush2.bf16.msra.mxu0 %v1282
    %1554 = vmatprep.subr.bf16.mxu0 %v1280
    %1555 = vmatpush2.bf16.msra.mxu0 %v1279
    %1556 = vmatprep.subr.bf16.mxu0 %v1277
    %1557 = vmatpush2.bf16.msra.mxu0 %v1276
    %1558 = vmatprep.mubr.bf16.mxu0 %v669
    %1559 = vmatmul.mubr.bf16.gmra.mxu0 %v668
    %v1560 = vpop.f32.mrf.mxu0
    %v1561 = vadd.f32 %v1520, %v1560
    %v1562 = vpop.f32.mrf.mxu0
    %v1563 = vadd.f32 %v1522, %v1562
    %v1564 = vpop.f32.mrf.mxu0
    %v1565 = vpop.f32.mrf.mxu0
    %1566 = vdwg.mxu0
    %1567 = vmatprep.subr.bf16.mxu0 0
    %1568 = vmatpush1.bf16.msra.mxu0 %v1179
    %1569 = vmatprep.subr.bf16.mxu0 0
    %1570 = vmatpush1.bf16.msra.mxu0 %v1176
    %1571 = vmatprep.subr.bf16.mxu0 0
    %1572 = vmatpush1.bf16.msra.mxu0 %v1173
    %1573 = vmatprep.subr.bf16.mxu0 0
    %1574 = vmatpush1.bf16.msra.mxu0 %v1170
    %1575 = vmatprep.subr.bf16.mxu0 0
    %1576 = vmatpush1.bf16.msra.mxu0 %v1167
    %1577 = vmatprep.subr.bf16.mxu0 0
    %1578 = vmatpush1.bf16.msra.mxu0 %v1164
    %1579 = vmatprep.subr.bf16.mxu0 0
    %1580 = vmatpush1.bf16.msra.mxu0 %v1161
    %1581 = vmatprep.subr.bf16.mxu0 0
    %1582 = vmatpush1.bf16.msra.mxu0 %v1158
    %1583 = vmatprep.subr.bf16.mxu0 0
    %1584 = vmatpush2.bf16.msra.mxu0 %v1203
    %1585 = vmatprep.subr.bf16.mxu0 0
    %1586 = vmatpush2.bf16.msra.mxu0 %v1200
    %1587 = vmatprep.subr.bf16.mxu0 0
    %1588 = vmatpush2.bf16.msra.mxu0 %v1197
    %1589 = vmatprep.subr.bf16.mxu0 0
    %1590 = vmatpush2.bf16.msra.mxu0 %v1194
    %1591 = vmatprep.subr.bf16.mxu0 0
    %1592 = vmatpush2.bf16.msra.mxu0 %v1191
    %1593 = vmatprep.subr.bf16.mxu0 0
    %1594 = vmatpush2.bf16.msra.mxu0 %v1188
    %1595 = vmatprep.subr.bf16.mxu0 0
    %1596 = vmatpush2.bf16.msra.mxu0 %v1185
    %1597 = vmatprep.subr.bf16.mxu0 0
    %1598 = vmatpush2.bf16.msra.mxu0 %v1182
    %1599 = vmatprep.mubr.bf16.mxu0 %v665
    %1600 = vmatmul.mubr.bf16.gmra.mxu0 %v664
    %v1601 = vpop.f32.mrf.mxu0
    %v1602 = vadd.f32 %v650, %v1601
    %v1603 = vpop.f32.mrf.mxu0
    %v1604 = vpop.f32.mrf.mxu0
    %v1605 = vpop.f32.mrf.mxu0
    %1606 = vdwg.mxu0
    %1607 = vmatprep.subr.bf16.mxu0 0
    %1608 = vmatpush1.bf16.msra.mxu0 %v1227
    %1609 = vmatprep.subr.bf16.mxu0 0
    %1610 = vmatpush1.bf16.msra.mxu0 %v1224
    %1611 = vmatprep.subr.bf16.mxu0 0
    %1612 = vmatpush1.bf16.msra.mxu0 %v1221
    %1613 = vmatprep.subr.bf16.mxu0 0
    %1614 = vmatpush1.bf16.msra.mxu0 %v1218
    %1615 = vmatprep.subr.bf16.mxu0 0
    %1616 = vmatpush1.bf16.msra.mxu0 %v1215
    %1617 = vmatprep.subr.bf16.mxu0 0
    %1618 = vmatpush1.bf16.msra.mxu0 %v1212
    %1619 = vmatprep.subr.bf16.mxu0 0
    %1620 = vmatpush1.bf16.msra.mxu0 %v1209
    %1621 = vmatprep.subr.bf16.mxu0 0
    %1622 = vmatpush1.bf16.msra.mxu0 %v1206
    %1623 = vmatprep.subr.bf16.mxu0 0
    %1624 = vmatpush2.bf16.msra.mxu0 %v1251
    %1625 = vmatprep.subr.bf16.mxu0 0
    %1626 = vmatpush2.bf16.msra.mxu0 %v1248
    %1627 = vmatprep.subr.bf16.mxu0 0
    %1628 = vmatpush2.bf16.msra.mxu0 %v1245
    %1629 = vmatprep.subr.bf16.mxu0 0
    %1630 = vmatpush2.bf16.msra.mxu0 %v1242
    %1631 = vmatprep.subr.bf16.mxu0 0
    %1632 = vmatpush2.bf16.msra.mxu0 %v1239
    %1633 = vmatprep.subr.bf16.mxu0 0
    %1634 = vmatpush2.bf16.msra.mxu0 %v1236
    %1635 = vmatprep.subr.bf16.mxu0 0
    %1636 = vmatpush2.bf16.msra.mxu0 %v1233
    %1637 = vmatprep.subr.bf16.mxu0 0
    %1638 = vmatpush2.bf16.msra.mxu0 %v1230
    %1639 = vmatprep.mubr.bf16.mxu0 %v667
    %1640 = vmatmul.mubr.bf16.gmra.mxu0 %v666
    %v1641 = vpop.f32.mrf.mxu0
    %v1642 = vadd.f32 %v1602, %v1641
    %v1643 = vpop.f32.mrf.mxu0
    %v1644 = vpop.f32.mrf.mxu0
    %v1645 = vpop.f32.mrf.mxu0
    %1646 = vdwg.mxu0
    %1647 = vmatprep.subr.bf16.mxu0 0
    %1648 = vmatpush1.bf16.msra.mxu0 %v1275
    %1649 = vmatprep.subr.bf16.mxu0 0
    %1650 = vmatpush1.bf16.msra.mxu0 %v1272
    %1651 = vmatprep.subr.bf16.mxu0 0
    %1652 = vmatpush1.bf16.msra.mxu0 %v1269
    %1653 = vmatprep.subr.bf16.mxu0 0
    %1654 = vmatpush1.bf16.msra.mxu0 %v1266
    %1655 = vmatprep.subr.bf16.mxu0 0
    %1656 = vmatpush1.bf16.msra.mxu0 %v1263
    %1657 = vmatprep.subr.bf16.mxu0 0
    %1658 = vmatpush1.bf16.msra.mxu0 %v1260
    %1659 = vmatprep.subr.bf16.mxu0 0
    %1660 = vmatpush1.bf16.msra.mxu0 %v1257
    %1661 = vmatprep.subr.bf16.mxu0 0
    %1662 = vmatpush1.bf16.msra.mxu0 %v1254
    %1663 = vmatprep.subr.bf16.mxu0 0
    %1664 = vmatpush2.bf16.msra.mxu0 %v1299
    %1665 = vmatprep.subr.bf16.mxu0 0
    %1666 = vmatpush2.bf16.msra.mxu0 %v1296
    %1667 = vmatprep.subr.bf16.mxu0 0
    %1668 = vmatpush2.bf16.msra.mxu0 %v1293
    %1669 = vmatprep.subr.bf16.mxu0 0
    %1670 = vmatpush2.bf16.msra.mxu0 %v1290
    %1671 = vmatprep.subr.bf16.mxu0 0
    %1672 = vmatpush2.bf16.msra.mxu0 %v1287
    %1673 = vmatprep.subr.bf16.mxu0 0
    %1674 = vmatpush2.bf16.msra.mxu0 %v1284
    %1675 = vmatprep.subr.bf16.mxu0 0
    %1676 = vmatpush2.bf16.msra.mxu0 %v1281
    %1677 = vmatprep.subr.bf16.mxu0 0
    %1678 = vmatpush2.bf16.msra.mxu0 %v1278
    %1679 = vmatprep.mubr.bf16.mxu0 %v669
    %1680 = vmatmul.mubr.bf16.gmra.mxu0 %v668
    %v1681 = vpop.f32.mrf.mxu0
    %v1682 = vadd.f32 %v1642, %v1681
    %v1683 = vpop.f32.mrf.mxu0
    %v1684 = vpop.f32.mrf.mxu0
    %v1685 = vpop.f32.mrf.mxu0
    %1686 = vdwg.mxu0
    %v1687 = vld [vmem:[%s8] sm:$0x7]
    %v1689 = vlaneseq
    %v1690 = vshrl.u32 %v1689, 7
    %v1691 = vsub.s32 0, %v1690
    %v1692 = vrot.slane %v1687, %v1691
    %v1693 = vlaneseq
    %v1694 = vshrl.u32 %v1693, 7
    %v1695 = vsub.s32 1, %v1694
    %v1696 = vrot.slane %v1687, %v1695
    %v1697 = vlaneseq
    %v1698 = vshrl.u32 %v1697, 7
    %v1699 = vsub.s32 2, %v1698
    %v1700 = vrot.slane %v1687, %v1699
    %v1704 = vadd.f32 %v1561, %v1692
    %v1705 = vadd.f32 %v1563, %v1696
    %v1706 = vadd.f32 %v1682, %v1700
    %v1707 = vmax.f32 %v1704, 0.0
    %v1708 = vmax.f32 %v1705, 0.0
    %v1709 = vpack.c.bf16 %v1707, %v1707
    %v1710 = vpack.c.bf16 %v1708, %v1708
    %v1711 = vxor.u32 %v1706, 2147483648
    %v1712 = vmul.f32 %v1711, 1.442695
    %v1713 = vpow.pop %v1712
    %v1714 = vadd.f32 %v1713, 1.0
    %v1715 = vrcp.pop %v1714
    %v1716 = vmul.f32 1.0, %v1715
    %v1717 = vld [vmem:[#allocation8] sm:$0xf]
    %v1718 = vld [vmem:[#allocation8 + $0x4] sm:$0xf]
    %v1719 = vld [vmem:[#allocation8 + $0x8] sm:$0xf]
    %v1720 = vld [vmem:[#allocation8 + $0xc] sm:$0xf]
    %v1721 = vld [vmem:[#allocation8 + $0x10] sm:$0xf]
    %v1722 = vld [vmem:[#allocation8 + $0x14] sm:$0xf]
    %v1723 = vld [vmem:[#allocation8 + $0x18] sm:$0xf]
    %v1724 = vld [vmem:[#allocation8 + $0x1c] sm:$0xf]
    %v1725 = vld [vmem:[#allocation8 + $0x20] sm:$0xf]
    %v1726 = vld [vmem:[#allocation8 + $0x24] sm:$0xf]
    %v1727 = vld [vmem:[#allocation8 + $0x28] sm:$0xf]
    %v1728 = vld [vmem:[#allocation8 + $0x2c] sm:$0xf]
    %v1729 = vld [vmem:[#allocation8 + $0x30] sm:$0xf]
    %v1730 = vld [vmem:[#allocation8 + $0x34] sm:$0xf]
    %v1731 = vld [vmem:[#allocation8 + $0x38] sm:$0xf]
    %v1732 = vld [vmem:[#allocation8 + $0x3c] sm:$0xf]
    %v1733 = vld [vmem:[#allocation8 + $0x40] sm:$0xf]
    %v1734 = vld [vmem:[#allocation8 + $0x44] sm:$0xf]
    %v1735 = vld [vmem:[#allocation8 + $0x48] sm:$0xf]
    %v1736 = vld [vmem:[#allocation8 + $0x4c] sm:$0xf]
    %v1737 = vld [vmem:[#allocation8 + $0x50] sm:$0xf]
    %v1738 = vld [vmem:[#allocation8 + $0x54] sm:$0xf]
    %v1739 = vld [vmem:[#allocation8 + $0x58] sm:$0xf]
    %v1740 = vld [vmem:[#allocation8 + $0x5c] sm:$0xf]
    %v1741 = vld [vmem:[#allocation8 + $0x60] sm:$0xf]
    %v1742 = vld [vmem:[#allocation8 + $0x64] sm:$0xf]
    %v1743 = vld [vmem:[#allocation8 + $0x68] sm:$0xf]
    %v1744 = vld [vmem:[#allocation8 + $0x6c] sm:$0xf]
    %v1745 = vld [vmem:[#allocation8 + $0x70] sm:$0xf]
    %v1746 = vld [vmem:[#allocation8 + $0x74] sm:$0xf]
    %v1747 = vld [vmem:[#allocation8 + $0x78] sm:$0xf]
    %v1748 = vld [vmem:[#allocation8 + $0x7c] sm:$0xf]
    %v1749 = vld [vmem:[%s10] sm:$0x1]
    %v1751 = vlaneseq
    %v1752 = vshrl.u32 %v1751, 7
    %v1753 = vsub.s32 0, %v1752
    %v1754 = vrot.slane %v1749, %v1753
    %v1788 = vunpack.c.l.b16 %v1717
    %v1789 = vunpack.c.l.b16 %v1718
    %v1790 = vunpack.c.l.b16 %v1719
    %v1791 = vunpack.c.l.b16 %v1720
    %v1792 = vunpack.c.l.b16 %v1721
    %v1793 = vunpack.c.l.b16 %v1722
    %v1794 = vunpack.c.l.b16 %v1723
    %v1795 = vunpack.c.l.b16 %v1724
    %v1796 = vunpack.c.l.b16 %v1725
    %v1797 = vunpack.c.l.b16 %v1726
    %v1798 = vunpack.c.l.b16 %v1727
    %v1799 = vunpack.c.l.b16 %v1728
    %v1800 = vunpack.c.l.b16 %v1729
    %v1801 = vunpack.c.l.b16 %v1730
    %v1802 = vunpack.c.l.b16 %v1731
    %v1803 = vunpack.c.l.b16 %v1732
    %v1804 = vunpack.c.l.b16 %v1733
    %v1805 = vunpack.c.l.b16 %v1734
    %v1806 = vunpack.c.l.b16 %v1735
    %v1807 = vunpack.c.l.b16 %v1736
    %v1808 = vunpack.c.l.b16 %v1737
    %v1809 = vunpack.c.l.b16 %v1738
    %v1810 = vunpack.c.l.b16 %v1739
    %v1811 = vunpack.c.l.b16 %v1740
    %v1812 = vunpack.c.l.b16 %v1741
    %v1813 = vunpack.c.l.b16 %v1742
    %v1814 = vunpack.c.l.b16 %v1743
    %v1815 = vunpack.c.l.b16 %v1744
    %v1816 = vunpack.c.l.b16 %v1745
    %v1817 = vunpack.c.l.b16 %v1746
    %v1818 = vunpack.c.l.b16 %v1747
    %v1819 = vunpack.c.l.b16 %v1748
    %v1820 = vpack.c.b16 %v1789, %v1788
    %v1821 = vpack.c.b16 %v1791, %v1790
    %v1822 = vpack.c.b16 %v1793, %v1792
    %v1823 = vpack.c.b16 %v1795, %v1794
    %v1824 = vpack.c.b16 %v1797, %v1796
    %v1825 = vpack.c.b16 %v1799, %v1798
    %v1826 = vpack.c.b16 %v1801, %v1800
    %v1827 = vpack.c.b16 %v1803, %v1802
    %v1828 = vpack.c.b16 %v1805, %v1804
    %v1829 = vpack.c.b16 %v1807, %v1806
    %v1830 = vpack.c.b16 %v1809, %v1808
    %v1831 = vpack.c.b16 %v1811, %v1810
    %v1832 = vpack.c.b16 %v1813, %v1812
    %v1833 = vpack.c.b16 %v1815, %v1814
    %v1834 = vpack.c.b16 %v1817, %v1816
    %v1835 = vpack.c.b16 %v1819, %v1818
    %1852 = vmatprep.subr.bf16.mxu0 0
    %1853 = vmatpush1.bf16.msra.mxu0 %v1827
    %1854 = vmatprep.subr.bf16.mxu0 0
    %1855 = vmatpush1.bf16.msra.mxu0 %v1826
    %1856 = vmatprep.subr.bf16.mxu0 0
    %1857 = vmatpush1.bf16.msra.mxu0 %v1825
    %1858 = vmatprep.subr.bf16.mxu0 0
    %1859 = vmatpush1.bf16.msra.mxu0 %v1824
    %1860 = vmatprep.subr.bf16.mxu0 0
    %1861 = vmatpush1.bf16.msra.mxu0 %v1823
    %1862 = vmatprep.subr.bf16.mxu0 0
    %1863 = vmatpush1.bf16.msra.mxu0 %v1822
    %1864 = vmatprep.subr.bf16.mxu0 0
    %1865 = vmatpush1.bf16.msra.mxu0 %v1821
    %1866 = vmatprep.subr.bf16.mxu0 0
    %1867 = vmatpush1.bf16.msra.mxu0 %v1820
    %1868 = vmatprep.subr.bf16.mxu0 0
    %1869 = vmatpush2.bf16.msra.mxu0 %v1835
    %1870 = vmatprep.subr.bf16.mxu0 0
    %1871 = vmatpush2.bf16.msra.mxu0 %v1834
    %1872 = vmatprep.subr.bf16.mxu0 0
    %1873 = vmatpush2.bf16.msra.mxu0 %v1833
    %1874 = vmatprep.subr.bf16.mxu0 0
    %1875 = vmatpush2.bf16.msra.mxu0 %v1832
    %1876 = vmatprep.subr.bf16.mxu0 0
    %1877 = vmatpush2.bf16.msra.mxu0 %v1831
    %1878 = vmatprep.subr.bf16.mxu0 0
    %1879 = vmatpush2.bf16.msra.mxu0 %v1830
    %1880 = vmatprep.subr.bf16.mxu0 0
    %1881 = vmatpush2.bf16.msra.mxu0 %v1829
    %1882 = vmatprep.subr.bf16.mxu0 0
    %1883 = vmatpush2.bf16.msra.mxu0 %v1828
    %1884 = vmatprep.mubr.bf16.mxu0 %v1710
    %1885 = vmatmul.mubr.bf16.gmra.mxu0 %v1709
    %v1886 = vpop.f32.mrf.mxu0
    %v1887 = vadd.f32 %v1754, %v1886
    %v1888 = vpop.f32.mrf.mxu0
    %v1889 = vpop.f32.mrf.mxu0
    %v1890 = vpop.f32.mrf.mxu0
    %1891 = vdwg.mxu0
    %v1892 = vmax.f32 %v1887, 0.0
    %v1893 = vpack.c.bf16 %v1892, %v1892
    %v1894 = vld [vmem:[#allocation10] sm:$0xf]
    %v1895 = vld [vmem:[#allocation10 + $0x4] sm:$0xf]
    %v1896 = vld [vmem:[#allocation10 + $0x8] sm:$0xf]
    %v1897 = vld [vmem:[#allocation10 + $0xc] sm:$0xf]
    %v1898 = vld [vmem:[#allocation10 + $0x10] sm:$0xf]
    %v1899 = vld [vmem:[#allocation10 + $0x14] sm:$0xf]
    %v1900 = vld [vmem:[#allocation10 + $0x18] sm:$0xf]
    %v1901 = vld [vmem:[#allocation10 + $0x1c] sm:$0xf]
    %v1902 = vld [vmem:[#allocation10 + $0x20] sm:$0xf]
    %v1903 = vld [vmem:[#allocation10 + $0x24] sm:$0xf]
    %v1904 = vld [vmem:[#allocation10 + $0x28] sm:$0xf]
    %v1905 = vld [vmem:[#allocation10 + $0x2c] sm:$0xf]
    %v1906 = vld [vmem:[#allocation10 + $0x30] sm:$0xf]
    %v1907 = vld [vmem:[#allocation10 + $0x34] sm:$0xf]
    %v1908 = vld [vmem:[#allocation10 + $0x38] sm:$0xf]
    %v1909 = vld [vmem:[#allocation10 + $0x3c] sm:$0xf]
    %v1910 = vld [vmem:[%s12] sm:$0x1]
    %v1912 = vlaneseq
    %v1913 = vshrl.u32 %v1912, 7
    %v1914 = vsub.s32 0, %v1913
    %v1915 = vrot.slane %v1910, %v1914
    %v1933 = vunpack.c.l.b16 %v1894
    %v1934 = vunpack.c.l.b16 %v1895
    %v1935 = vunpack.c.l.b16 %v1896
    %v1936 = vunpack.c.l.b16 %v1897
    %v1937 = vunpack.c.l.b16 %v1898
    %v1938 = vunpack.c.l.b16 %v1899
    %v1939 = vunpack.c.l.b16 %v1900
    %v1940 = vunpack.c.l.b16 %v1901
    %v1941 = vunpack.c.l.b16 %v1902
    %v1942 = vunpack.c.l.b16 %v1903
    %v1943 = vunpack.c.l.b16 %v1904
    %v1944 = vunpack.c.l.b16 %v1905
    %v1945 = vunpack.c.l.b16 %v1906
    %v1946 = vunpack.c.l.b16 %v1907
    %v1947 = vunpack.c.l.b16 %v1908
    %v1948 = vunpack.c.l.b16 %v1909
    %v1949 = vpack.c.b16 %v1934, %v1933
    %v1950 = vpack.c.b16 %v1936, %v1935
    %v1951 = vpack.c.b16 %v1938, %v1937
    %v1952 = vpack.c.b16 %v1940, %v1939
    %v1953 = vpack.c.b16 %v1942, %v1941
    %v1954 = vpack.c.b16 %v1944, %v1943
    %v1955 = vpack.c.b16 %v1946, %v1945
    %v1956 = vpack.c.b16 %v1948, %v1947
    %1965 = vmatprep.subr.bf16.mxu0 0
    %1966 = vmatpush1.bf16.msra.mxu0 %v1956
    %1967 = vmatprep.subr.bf16.mxu0 0
    %1968 = vmatpush1.bf16.msra.mxu0 %v1955
    %1969 = vmatprep.subr.bf16.mxu0 0
    %1970 = vmatpush1.bf16.msra.mxu0 %v1954
    %1971 = vmatprep.subr.bf16.mxu0 0
    %1972 = vmatpush1.bf16.msra.mxu0 %v1953
    %1973 = vmatprep.subr.bf16.mxu0 0
    %1974 = vmatpush1.bf16.msra.mxu0 %v1952
    %1975 = vmatprep.subr.bf16.mxu0 0
    %1976 = vmatpush1.bf16.msra.mxu0 %v1951
    %1977 = vmatprep.subr.bf16.mxu0 0
    %1978 = vmatpush1.bf16.msra.mxu0 %v1950
    %1979 = vmatprep.subr.bf16.mxu0 0
    %1980 = vmatpush1.bf16.msra.mxu0 %v1949
    %1981 = vmatprep.subr.bf16.mxu0 0
    %1982 = vmatpush2.bf16.msra.mxu0 0
    %1983 = vmatprep.subr.bf16.mxu0 0
    %1984 = vmatpush2.bf16.msra.mxu0 0
    %1985 = vmatprep.subr.bf16.mxu0 0
    %1986 = vmatpush2.bf16.msra.mxu0 0
    %1987 = vmatprep.subr.bf16.mxu0 0
    %1988 = vmatpush2.bf16.msra.mxu0 0
    %1989 = vmatprep.subr.bf16.mxu0 0
    %1990 = vmatpush2.bf16.msra.mxu0 0
    %1991 = vmatprep.subr.bf16.mxu0 0
    %1992 = vmatpush2.bf16.msra.mxu0 0
    %1993 = vmatprep.subr.bf16.mxu0 0
    %1994 = vmatpush2.bf16.msra.mxu0 0
    %1995 = vmatprep.subr.bf16.mxu0 0
    %1996 = vmatpush2.bf16.msra.mxu0 0
    %1997 = vmatprep.mubr.bf16.mxu0 0
    %1998 = vmatmul.mubr.bf16.gmra.mxu0 %v1893
    %v1999 = vpop.f32.mrf.mxu0
    %v2000 = vadd.f32 %v1915, %v1999
    %v2001 = vpop.f32.mrf.mxu0
    %v2002 = vpop.f32.mrf.mxu0
    %v2003 = vpop.f32.mrf.mxu0
    %2004 = vdwg.mxu0
    %2005 = vst [vmem:[#allocation11] sm:$0xff] %v2000
    %2006 = vst [vmem:[#allocation11 + $0x8] sm:$0xff] %v1716
    // Predicated region
    $region74: #{tpu_custom_call.1} parent=1 // pred_check
      _
    $region75: #{tpu_custom_call.1} parent=1 // pred_check_branch
      %2008 = sbr.rel (0) target = $region77
    $region76: #{tpu_custom_call.1} parent=1 // pred_region
      %s2010 = ssub.s32 256, 256
      %2011 = vsyncadd [#allocation4], %s2010
      %s2013 = sshll.u32 [#allocation11], 4
      %s2014 = int_to_ptr.vmem [resolvable:$true] %s2013
      %2016 = dma.vmem_to_hbm [thread:$0]  %s2014, 256, %s13, [#allocation4]
    $region77: #{tpu_custom_call.1} parent=1 // pred_fallthru
      _
    // Predicated region
    $region78: #{tpu_custom_call.1} parent=1 // pred_check
      _
    $region79: #{tpu_custom_call.1} parent=1 // pred_check_branch
      %2018 = sbr.rel (0) target = $region81
    $region80: #{tpu_custom_call.1} parent=1 // pred_region
      %2019 = dma.done [#allocation4], 256
    $region81: #{tpu_custom_call.1} parent=1 // pred_fallthru
      _
    %2020 = vsyncpa [#allocation3], 1
    %2021 = vsyncpa [#allocation6], 1
    %2022 = vsyncpa [#allocation9], 1
    %2023 = vsyncpa [#allocation4], 1

</llo_original>
